<compile_context>
chip_gen: v5e
topology: v5e:2x2
jax: 0.10.0
libtpu: 0.0.40
codegen_flags: <defaults>
</compile_context>

<pallas_src>
import functools
import math

import jax
import jax.numpy as jnp
from jax import lax
from jax.experimental import pallas as pl
from jax.experimental.pallas import tpu as pltpu

_ROW_CHUNK = 512          # in-kernel row-chunk size (bounds live vregs)
_MAX_TILE = 4096          # max batch rows per grid step


def _round_up(n, m):
    return ((n + m - 1) // m) * m


def mlp_softmax_kernel(x_ref, w1_ref, b1_ref, w2_ref, b2_ref, o_ref, *,
                       n_chunks, row_chunk):
    # x: (TB, I) f32 | w1: (H, I) f32 | b1: (1, H) f32 | w2: (O, H) f32 | b2: (1, O) f32
    w1 = w1_ref[...]
    w2 = w2_ref[...]
    b1 = b1_ref[...]
    b2 = b2_ref[...]

    def chunk(c, carry):
        r = pl.multiple_of(c * row_chunk, row_chunk)
        xc = x_ref[pl.ds(r, row_chunk), :]                               # (RC, I)
        # fc1 + ReLU: contract the I axis of both x and W1 (i.e. x @ W1^T), MXU f32 acc.
        h = lax.dot_general(xc, w1, (((1,), (1,)), ((), ())),
                            preferred_element_type=jnp.float32)          # (RC, H)
        h = jnp.maximum(h + b1, 0.0)
        # fc2: h @ W2^T
        logits = lax.dot_general(h, w2, (((1,), (1,)), ((), ())),
                                 preferred_element_type=jnp.float32)     # (RC, O)
        logits = logits + b2
        # Numerically stable softmax over classes (last axis), f32.
        m = jnp.max(logits, axis=-1, keepdims=True)
        e = jnp.exp(logits - m)
        denom = jnp.sum(e, axis=-1, keepdims=True)
        o_ref[pl.ds(r, row_chunk), :] = (
            e * pl.reciprocal(denom, approx=True)).astype(o_ref.dtype)
        return carry

    if n_chunks == 1:
        chunk(0, 0)
    else:
        lax.fori_loop(0, n_chunks, chunk, 0, unroll=True)   # n_chunks <= 8 (short, fixed)


def logistic_regression_forward(x, w1, b1, w2, b2):
    """x: (B, I) f32.  w1: (H, I), b1: (H,), w2: (O, H), b2: (O,)  (PyTorch layouts)."""
    B, I = x.shape
    H, O = w1.shape[0], w2.shape[0]

    if B <= _ROW_CHUNK:
        # Single grid step, single chunk, no padding (full-extent block is always legal).
        Bp, TB, n_chunks, row_chunk = B, B, 1, B
    else:
        Bp = _round_up(B, 8)                        # sublane multiple for tiled blocks
        if Bp != B:
            x = jnp.pad(x, ((0, Bp - B), (0, 0)))   # rare; only when B % 8 != 0
        n_tiles = max(2, pl.cdiv(Bp, _MAX_TILE))    # >=2 tiles -> both v7x TCs get work
        TB = _round_up(pl.cdiv(Bp, n_tiles), _ROW_CHUNK)
        n_chunks = TB // _ROW_CHUNK
        row_chunk = _ROW_CHUNK
    grid = (pl.cdiv(Bp, TB),)

    b1c = b1.reshape(1, H).astype(jnp.float32)
    b2c = b2.reshape(1, O).astype(jnp.float32)

    cost = pl.CostEstimate(
        flops=2 * Bp * (I * H + H * O),
        transcendentals=Bp * O,
        bytes_accessed=Bp * I * 4 + (H * I + O * H + H + O) * 4 + Bp * O * 4,
    )

    kernel = functools.partial(mlp_softmax_kernel,
                               n_chunks=n_chunks, row_chunk=row_chunk)

    out = pl.pallas_call(
        kernel,
        out_shape=jax.ShapeDtypeStruct((Bp, O), jnp.float32),
        grid=grid,
        in_specs=[
            pl.BlockSpec((TB, I), lambda i: (i, 0)),   # streamed x tile, natural layout
            pl.BlockSpec((H, I), lambda i: (0, 0)),    # weights: constant index -> resident
            pl.BlockSpec((1, H), lambda i: (0, 0)),
            pl.BlockSpec((O, H), lambda i: (0, 0)),
            pl.BlockSpec((1, O), lambda i: (0, 0)),
        ],
        out_specs=pl.BlockSpec((TB, O), lambda i: (i, 0)),
        compiler_params=pltpu.CompilerParams(
            dimension_semantics=("parallel",)),        # batch axis shards across TCs on v7x
        cost_estimate=cost,
    )(x, w1, b1c, w2, b2c)

    return out if Bp == B else out[:B]


def init_params(key, input_size, hidden_size, output_size):
    # PyTorch nn.Linear default init: U(-1/sqrt(fan_in), 1/sqrt(fan_in)), (out, in) layout.
    k1, k2, k3, k4 = jax.random.split(key, 4)
    bound1 = 1.0 / math.sqrt(input_size)
    bound2 = 1.0 / math.sqrt(hidden_size)
    w1 = jax.random.uniform(k1, (hidden_size, input_size), jnp.float32, -bound1, bound1)
    b1 = jax.random.uniform(k2, (hidden_size,), jnp.float32, -bound1, bound1)
    w2 = jax.random.uniform(k3, (output_size, hidden_size), jnp.float32, -bound2, bound2)
    b2 = jax.random.uniform(k4, (output_size,), jnp.float32, -bound2, bound2)
    return w1, b1, w2, b2


if __name__ == "__main__":
    # Batch large enough to exercise the 2-tile grid / in-kernel chunking path.
    batch, input_size, hidden_size, output_size = 1024, 32, 32, 16

    key = jax.random.PRNGKey(0)
    kx, kp = jax.random.split(key)
    x = jax.random.normal(kx, (batch, input_size), jnp.float32)
    w1, b1, w2, b2 = init_params(kp, input_size, hidden_size, output_size)

    out = jax.block_until_ready(logistic_regression_forward(x, w1, b1, w2, b2))

    # Pure-JAX f32 reference with PyTorch forward semantics (fc1 -> ReLU -> fc2 -> softmax).
    h_ref = jnp.maximum(jnp.dot(x, w1.T, preferred_element_type=jnp.float32) + b1, 0.0)
    logits_ref = jnp.dot(h_ref, w2.T, preferred_element_type=jnp.float32) + b2
    ref = jax.nn.softmax(logits_ref, axis=-1)

    assert out.shape == (batch, output_size)
    # Tolerance covers approx reciprocal (~2^-14 rel) and TPU matmul precision differences.
    assert bool(jnp.allclose(out, ref, atol=1e-2, rtol=2e-2))

    print("KERNEL_OK")
</pallas_src>

<mosaic_0001>
module attributes {stable_mosaic.version = 11 : i64} {
  func.func @mlp_softmax_kernel(%arg0: i32, %arg1: memref<512x32xf32, #tpu.memory_space<vmem>>, %arg2: memref<32x32xf32, #tpu.memory_space<vmem>>, %arg3: memref<1x32xf32, #tpu.memory_space<vmem>>, %arg4: memref<16x32xf32, #tpu.memory_space<vmem>>, %arg5: memref<1x16xf32, #tpu.memory_space<vmem>>, %arg6: memref<512x16xf32, #tpu.memory_space<vmem>>) attributes {dimension_semantics = [#tpu.dimension_semantics<parallel>], iteration_bounds = array<i64: 2>, scalar_prefetch = 0 : i64, scratch_operands = 0 : i64, tpu.core_type = #tpu.core_type<tc>, window_params = [{transform_indices = @transform_0, window_bounds = array<i64: 512, 32>}, {pipeline_mode = #tpu.pipeline_mode<synchronous>, transform_indices = @transform_1, window_bounds = array<i64: 32, 32>}, {pipeline_mode = #tpu.pipeline_mode<synchronous>, transform_indices = @transform_2, window_bounds = array<i64: 1, 32>}, {pipeline_mode = #tpu.pipeline_mode<synchronous>, transform_indices = @transform_3, window_bounds = array<i64: 16, 32>}, {pipeline_mode = #tpu.pipeline_mode<synchronous>, transform_indices = @transform_4, window_bounds = array<i64: 1, 16>}, {transform_indices = @transform_5, window_bounds = array<i64: 512, 16>}]} {
    %c0 = arith.constant 0 : index
    %c0_0 = arith.constant 0 : index
    %0 = vector.load %arg2[%c0, %c0_0] : memref<32x32xf32, #tpu.memory_space<vmem>>, vector<32x32xf32>
    %c0_1 = arith.constant 0 : index
    %c0_2 = arith.constant 0 : index
    %1 = vector.load %arg4[%c0_1, %c0_2] : memref<16x32xf32, #tpu.memory_space<vmem>>, vector<16x32xf32>
    %c0_3 = arith.constant 0 : index
    %c0_4 = arith.constant 0 : index
    %2 = vector.load %arg3[%c0_3, %c0_4] : memref<1x32xf32, #tpu.memory_space<vmem>>, vector<1x32xf32>
    %c0_5 = arith.constant 0 : index
    %c0_6 = arith.constant 0 : index
    %3 = vector.load %arg5[%c0_5, %c0_6] : memref<1x16xf32, #tpu.memory_space<vmem>>, vector<1x16xf32>
    %c0_i32 = arith.constant 0 : i32
    %4 = tpu.assume_multiple %c0_i32, 512 : i32
    %5 = arith.index_cast %4 : i32 to index
    %c0_7 = arith.constant 0 : index
    %6 = vector.load %arg1[%5, %c0_7] : memref<512x32xf32, #tpu.memory_space<vmem>>, vector<512x32xf32>
    %cst = arith.constant dense<0.000000e+00> : vector<512x32xf32>
    %7 = tpu.matmul %6, %0, %cst {dimension_numbers = #tpu.dot_dimension_numbers<[1], [1], [0], [0], [0, 0, 1, 0], [], []>} : vector<512x32xf32>, vector<32x32xf32>, vector<512x32xf32> -> vector<512x32xf32>
    %8 = vector.broadcast %2 : vector<1x32xf32> to vector<512x32xf32>
    %9 = arith.addf %7, %8 : vector<512x32xf32>
    %cst_8 = arith.constant 0.000000e+00 : f32
    %10 = vector.broadcast %cst_8 : f32 to vector<512x32xf32>
    %11 = arith.maximumf %9, %10 : vector<512x32xf32>
    %cst_9 = arith.constant dense<0.000000e+00> : vector<512x16xf32>
    %12 = tpu.matmul %11, %1, %cst_9 {dimension_numbers = #tpu.dot_dimension_numbers<[1], [1], [0], [0], [0, 0, 1, 0], [], []>} : vector<512x32xf32>, vector<16x32xf32>, vector<512x16xf32> -> vector<512x16xf32>
    %13 = vector.broadcast %3 : vector<1x16xf32> to vector<512x16xf32>
    %14 = arith.addf %12, %13 : vector<512x16xf32>
    %cst_10 = arith.constant dense<0xFF800000> : vector<512xf32>
    %15 = vector.multi_reduction <maximumf>, %14, %cst_10 [1] : vector<512x16xf32> to vector<512xf32>
    %16 = vector.shape_cast %15 : vector<512xf32> to vector<512x1xf32>
    %17 = vector.broadcast %16 : vector<512x1xf32> to vector<512x16xf32>
    %18 = arith.subf %14, %17 : vector<512x16xf32>
    %19 = math.exp %18 : vector<512x16xf32>
    %cst_11 = arith.constant dense<0.000000e+00> : vector<512xf32>
    %20 = vector.multi_reduction <add>, %19, %cst_11 [1] : vector<512x16xf32> to vector<512xf32>
    %21 = vector.shape_cast %20 : vector<512xf32> to vector<512x1xf32>
    %22 = tpu.reciprocal %21 {approx = true} : vector<512x1xf32> -> vector<512x1xf32>
    %23 = vector.broadcast %22 : vector<512x1xf32> to vector<512x16xf32>
    %24 = arith.mulf %19, %23 : vector<512x16xf32>
    %25 = arith.index_cast %4 : i32 to index
    %c0_12 = arith.constant 0 : index
    %26 = vector.load %arg6[%25, %c0_12] : memref<512x16xf32, #tpu.memory_space<vmem>>, vector<512x16xf32>
    tpu.vector_store %arg6[%25, %c0_12], %24 {strides = array<i32>} : memref<512x16xf32, #tpu.memory_space<vmem>>, vector<512x16xf32>,
    return
  }
  func.func @transform_0(%arg0: i32) -> (i32, i32) {
    %c0_i32 = arith.constant 0 : i32
    %c0_i32_0 = arith.constant 0 : i32
    return %arg0, %c0_i32 : i32, i32
  }
  func.func @transform_1(%arg0: i32) -> (i32, i32) {
    %c0_i32 = arith.constant 0 : i32
    %c0_i32_0 = arith.constant 0 : i32
    %c0_i32_1 = arith.constant 0 : i32
    return %c0_i32, %c0_i32_0 : i32, i32
  }
  func.func @transform_2(%arg0: i32) -> (i32, i32) {
    %c0_i32 = arith.constant 0 : i32
    %c0_i32_0 = arith.constant 0 : i32
    %c0_i32_1 = arith.constant 0 : i32
    return %c0_i32, %c0_i32_0 : i32, i32
  }
  func.func @transform_3(%arg0: i32) -> (i32, i32) {
    %c0_i32 = arith.constant 0 : i32
    %c0_i32_0 = arith.constant 0 : i32
    %c0_i32_1 = arith.constant 0 : i32
    return %c0_i32, %c0_i32_0 : i32, i32
  }
  func.func @transform_4(%arg0: i32) -> (i32, i32) {
    %c0_i32 = arith.constant 0 : i32
    %c0_i32_0 = arith.constant 0 : i32
    %c0_i32_1 = arith.constant 0 : i32
    return %c0_i32, %c0_i32_0 : i32, i32
  }
  func.func @transform_5(%arg0: i32) -> (i32, i32) {
    %c0_i32 = arith.constant 0 : i32
    %c0_i32_0 = arith.constant 0 : i32
    return %arg0, %c0_i32 : i32, i32
  }
}

</mosaic_0001>

<llo_original>
// kernel: tpu_custom_call.1
$region0: #{tpu_custom_call.1}
  #allocation0 [shape = 'u32[]', space=smem, size = 0x4, offset = 0x4, fixed_abs, tag = 'smem constant byte address 0x4 - core index']
  #allocation1 [shape = 'u32[72,128]{1,0:T(1,128)}', space=vmem, size = 0x9000, scoped, tag = 'internal scratch']
  %s0 = inlined_call_operand.vmem [shape: f32[1024,32], index: 0, kind: input, shape index: {}]
  %s1 = inlined_call_operand.vmem [shape: f32[32,32], index: 1, kind: input, shape index: {}]
  %s2 = inlined_call_operand.vmem [shape: f32[1,32], index: 2, kind: input, shape index: {}]
  %s3 = inlined_call_operand.vmem [shape: f32[16,32], index: 3, kind: input, shape index: {}]
  %s4 = inlined_call_operand.vmem [shape: f32[1,16], index: 4, kind: input, shape index: {}]
  %s5 = inlined_call_operand.vmem [shape: f32[1024,16], index: 5, kind: output, shape index: {}]
  %s6 = sld [smem:[#allocation0]]
  $region53: #{tpu_custom_call.1} parent=0
    _
  %s8 = ssub.s32 1, %s6
  %s9 = scalar_select 0, %s8, %s6
  loop: start=0, step=1, limit=4
  $region2: #{tpu_custom_call.1} parent=0 // loop_pre_header
    _
  $region3: #{tpu_custom_call.1} parent=0 // loop_header
    %s11 = sphi 0, %s15
    %p12 = scmp.ge.s32.totalorder %s11, 4
    %s21 = sphi 0, %s23
    %s24 = sphi 0, %s21
    %s25 = sphi 0, %s24
    %s41 = sphi 0, %s25
    %s45 = sphi 0, %s45
    %s47 = sphi 0, %s45
    %s48 = sphi 0, %s47
    %s62 = sphi 0, %s48
    %s66 = sphi 0, %s66
    %s68 = sphi 0, %s66
    %s69 = sphi 0, %s68
    %s83 = sphi 0, %s69
    %s87 = sphi 0, %s87
    %s89 = sphi 0, %s87
    %s90 = sphi 0, %s89
    %s104 = sphi 0, %s90
    %s108 = sphi 0, %s108
    %s110 = sphi 0, %s108
    %s111 = sphi 0, %s110
    %s125 = sphi 0, %s111
    %s131 = sphi 0, %s133
    %s134 = sphi 0, %s131
    %s135 = sphi 0, %s134
    %s151 = sphi 0, %s135
  $region4: #{tpu_custom_call.1} parent=0 // loop_header_branch
    %14 = sbr.rel (%p12) target = $region8
  $region5: #{tpu_custom_call.1} parent=0 // loop_body
    %s16 = ssub.s32 %s11, 1
    %s17 = ssub.s32 %s11, 2
    %s18 = sadd.s32 %s11, 1
    %s19 = ssub.s32 %s11, %s18
    %p20 = scmp.eq.s32.totalorder %s19, 0
    %s22 = sadd.s32 %s21, 1
    %s23 = scalar_select %p20, %s21, %s22
    %p26 = pneg %p20
    %p27 = scmp.eq.s32.totalorder %s11, 1
    %p28 = por %p26, %p27
    %p29 = scmp.ne.s32.totalorder %s21, %s24
    %p30 = scmp.eq.s32.totalorder %s11, 0
    %p31 = por %p29, %p30
    %p32 = scmp.ne.s32.totalorder %s21, %s24
    %p33 = scmp.eq.s32.totalorder %s16, 1
    %p34 = por %p32, %p33
    %p35 = scmp.ne.s32.totalorder %s24, %s25
    %p36 = scmp.eq.s32.totalorder %s16, 0
    %p37 = por %p35, %p36
    %p38 = scmp.ne.s32.totalorder %s24, %s25
    %p39 = scmp.eq.s32.totalorder %s17, 1
    %p40 = por %p38, %p39
    %p42 = scmp.ne.s32.totalorder %s25, %s41
    %p43 = scmp.eq.s32.totalorder %s17, 0
    %p44 = por %p42, %p43
    %s46 = sadd.s32 %s45, 1
    %p49 = scmp.eq.s32.totalorder %s11, 1
    %p50 = scmp.ne.s32.totalorder %s45, %s47
    %p51 = scmp.eq.s32.totalorder %s11, 0
    %p52 = por %p50, %p51
    %p53 = scmp.ne.s32.totalorder %s45, %s47
    %p54 = scmp.eq.s32.totalorder %s16, 1
    %p55 = por %p53, %p54
    %p56 = scmp.ne.s32.totalorder %s47, %s48
    %p57 = scmp.eq.s32.totalorder %s16, 0
    %p58 = por %p56, %p57
    %p59 = scmp.ne.s32.totalorder %s47, %s48
    %p60 = scmp.eq.s32.totalorder %s17, 1
    %p61 = por %p59, %p60
    %p63 = scmp.ne.s32.totalorder %s48, %s62
    %p64 = scmp.eq.s32.totalorder %s17, 0
    %p65 = por %p63, %p64
    %s67 = sadd.s32 %s66, 1
    %p70 = scmp.eq.s32.totalorder %s11, 1
    %p71 = scmp.ne.s32.totalorder %s66, %s68
    %p72 = scmp.eq.s32.totalorder %s11, 0
    %p73 = por %p71, %p72
    %p74 = scmp.ne.s32.totalorder %s66, %s68
    %p75 = scmp.eq.s32.totalorder %s16, 1
    %p76 = por %p74, %p75
    %p77 = scmp.ne.s32.totalorder %s68, %s69
    %p78 = scmp.eq.s32.totalorder %s16, 0
    %p79 = por %p77, %p78
    %p80 = scmp.ne.s32.totalorder %s68, %s69
    %p81 = scmp.eq.s32.totalorder %s17, 1
    %p82 = por %p80, %p81
    %p84 = scmp.ne.s32.totalorder %s69, %s83
    %p85 = scmp.eq.s32.totalorder %s17, 0
    %p86 = por %p84, %p85
    %s88 = sadd.s32 %s87, 1
    %p91 = scmp.eq.s32.totalorder %s11, 1
    %p92 = scmp.ne.s32.totalorder %s87, %s89
    %p93 = scmp.eq.s32.totalorder %s11, 0
    %p94 = por %p92, %p93
    %p95 = scmp.ne.s32.totalorder %s87, %s89
    %p96 = scmp.eq.s32.totalorder %s16, 1
    %p97 = por %p95, %p96
    %p98 = scmp.ne.s32.totalorder %s89, %s90
    %p99 = scmp.eq.s32.totalorder %s16, 0
    %p100 = por %p98, %p99
    %p101 = scmp.ne.s32.totalorder %s89, %s90
    %p102 = scmp.eq.s32.totalorder %s17, 1
    %p103 = por %p101, %p102
    %p105 = scmp.ne.s32.totalorder %s90, %s104
    %p106 = scmp.eq.s32.totalorder %s17, 0
    %p107 = por %p105, %p106
    %s109 = sadd.s32 %s108, 1
    %p112 = scmp.eq.s32.totalorder %s11, 1
    %p113 = scmp.ne.s32.totalorder %s108, %s110
    %p114 = scmp.eq.s32.totalorder %s11, 0
    %p115 = por %p113, %p114
    %p116 = scmp.ne.s32.totalorder %s108, %s110
    %p117 = scmp.eq.s32.totalorder %s16, 1
    %p118 = por %p116, %p117
    %p119 = scmp.ne.s32.totalorder %s110, %s111
    %p120 = scmp.eq.s32.totalorder %s16, 0
    %p121 = por %p119, %p120
    %p122 = scmp.ne.s32.totalorder %s110, %s111
    %p123 = scmp.eq.s32.totalorder %s17, 1
    %p124 = por %p122, %p123
    %p126 = scmp.ne.s32.totalorder %s111, %s125
    %p127 = scmp.eq.s32.totalorder %s17, 0
    %p128 = por %p126, %p127
    %s129 = ssub.s32 %s11, %s18
    %p130 = scmp.eq.s32.totalorder %s129, 0
    %s132 = sadd.s32 %s131, 1
    %s133 = scalar_select %p130, %s131, %s132
    %p136 = pneg %p130
    %p137 = scmp.eq.s32.totalorder %s11, 1
    %p138 = por %p136, %p137
    %p139 = scmp.ne.s32.totalorder %s131, %s134
    %p140 = scmp.eq.s32.totalorder %s11, 0
    %p141 = por %p139, %p140
    %p142 = scmp.ne.s32.totalorder %s131, %s134
    %p143 = scmp.eq.s32.totalorder %s16, 1
    %p144 = por %p142, %p143
    %p145 = scmp.ne.s32.totalorder %s134, %s135
    %p146 = scmp.eq.s32.totalorder %s16, 0
    %p147 = por %p145, %p146
    %p148 = scmp.ne.s32.totalorder %s134, %s135
    %p149 = scmp.eq.s32.totalorder %s17, 1
    %p150 = por %p148, %p149
    %p152 = scmp.ne.s32.totalorder %s135, %s151
    %p153 = scmp.eq.s32.totalorder %s17, 0
    %p154 = por %p152, %p153
    %p155 = scmp.le.s32.totalorder 1, %s11
    %p156 = scmp.lt.s32.totalorder %s11, 3
    %p157 = pnand %p155, %p156
    %p158 = pneg %p157
    // Predicated region
    $region9: #{tpu_custom_call.1} parent=5 // pred_check
      _
    $region10: #{tpu_custom_call.1} parent=5 // pred_check_branch
      %160 = sbr.rel (%p157) target = $region12
    $region11: #{tpu_custom_call.1} parent=5 // pred_region
      %s161 = ssub.s32 %s11, 1
      // Predicated region
      $region13: #{tpu_custom_call.1} parent=11 // pred_check
        %p162 = pneg %p58
      $region14: #{tpu_custom_call.1} parent=11 // pred_check_branch
        %164 = sbr.rel (%p162) target = $region16
      $region15: #{tpu_custom_call.1} parent=11 // pred_region
        _
      $region16: #{tpu_custom_call.1} parent=11 // pred_fallthru
        _
      // Predicated region
      $region17: #{tpu_custom_call.1} parent=11 // pred_check
        %p165 = pneg %p79
      $region18: #{tpu_custom_call.1} parent=11 // pred_check_branch
        %167 = sbr.rel (%p165) target = $region20
      $region19: #{tpu_custom_call.1} parent=11 // pred_region
        _
      $region20: #{tpu_custom_call.1} parent=11 // pred_fallthru
        _
      // Predicated region
      $region21: #{tpu_custom_call.1} parent=11 // pred_check
        %p168 = pneg %p100
      $region22: #{tpu_custom_call.1} parent=11 // pred_check_branch
        %170 = sbr.rel (%p168) target = $region24
      $region23: #{tpu_custom_call.1} parent=11 // pred_region
        _
      $region24: #{tpu_custom_call.1} parent=11 // pred_fallthru
        _
      // Predicated region
      $region25: #{tpu_custom_call.1} parent=11 // pred_check
        %p171 = pneg %p121
      $region26: #{tpu_custom_call.1} parent=11 // pred_check_branch
        %173 = sbr.rel (%p171) target = $region28
      $region27: #{tpu_custom_call.1} parent=11 // pred_region
        _
      $region28: #{tpu_custom_call.1} parent=11 // pred_fallthru
        _
    $region12: #{tpu_custom_call.1} parent=5 // pred_fallthru
      _
    %p174 = scmp.lt.s32.totalorder %s11, 2
    // Predicated region
    $region29: #{tpu_custom_call.1} parent=5 // pred_check
      %p175 = pneg %p174
    $region30: #{tpu_custom_call.1} parent=5 // pred_check_branch
      %177 = sbr.rel (%p175) target = $region32
    $region31: #{tpu_custom_call.1} parent=5 // pred_region
      // Predicated region
      $region33: #{tpu_custom_call.1} parent=31 // pred_check
        %p178 = pneg %p31
      $region34: #{tpu_custom_call.1} parent=31 // pred_check_branch
        %180 = sbr.rel (%p178) target = $region36
      $region35: #{tpu_custom_call.1} parent=31 // pred_region
        %s181 = smul.u32 64, %s11
        %p182 = scmp.lt.s32.totalorder %s181, 127
        %s183 = scalar_select %p182, %s181, 127
        %s184 = smul.addr %s183, 8
        %s185 = scalar_lea.vmem %s0, %s184
        %s186 = smul.u32 64, %s11
      $region36: #{tpu_custom_call.1} parent=31 // pred_fallthru
        _
    $region32: #{tpu_custom_call.1} parent=5 // pred_fallthru
      _
    %p187 = scmp.le.s32.totalorder 1, %s11
    %p188 = scmp.lt.s32.totalorder %s11, 3
    %p189 = pnand %p187, %p188
    %p190 = pneg %p189
    // Predicated region
    $region37: #{tpu_custom_call.1} parent=5 // pred_check
      _
    $region38: #{tpu_custom_call.1} parent=5 // pred_check_branch
      %192 = sbr.rel (%p189) target = $region40
    $region39: #{tpu_custom_call.1} parent=5 // pred_region
      %s193 = ssub.s32 %s11, 1
      %s194 = smul.u32 64, %s16
      %p195 = scmp.lt.s32.totalorder %s194, 127
      %s196 = scalar_select %p195, %s194, 127
      %s197 = smul.addr %s196, 8
      %s198 = scalar_lea.vmem %s0, %s197
      %p199 = pneg %p37
      %p200 = pneg %p34
      %p201 = pneg %p58
      %p202 = pneg %p55
      %p203 = pneg %p79
      %p204 = pneg %p76
      %p205 = pneg %p100
      %p206 = pneg %p97
      %p207 = pneg %p121
      %p208 = pneg %p118
      %p209 = pneg %p147
      %p210 = pneg %p144
      %s211 = smul.u32 64, %s16
      %p212 = scmp.lt.s32.totalorder %s211, 127
      %s213 = scalar_select %p212, %s211, 127
      %s214 = smul.addr %s213, 8
      %s215 = scalar_lea.vmem %s5, %s214
      %s216 = smul.u32 64, %s16
      %p217 = scmp.lt.s32.totalorder %s216, 127
      %s218 = scalar_select %p217, %s216, 127
      %s219 = smul.addr %s218, 8
      %s220 = scalar_lea.vmem %s0, %s219
      %s221 = smul.u32 64, %s16
      %s222 = smul.u32 64, %s16
      %p223 = scmp.lt.s32.totalorder %s222, 127
      %s224 = scalar_select %p223, %s222, 127
      %s225 = smul.addr %s224, 8
      %s226 = scalar_lea.vmem %s5, %s225
      %s227 = smul.u32 64, %s16
      %v228 = vld [vmem:[%s1] sm:$0xff]
      %v229 = vld [vmem:[%s1 + $0x8] sm:$0xff]
      %v230 = vld [vmem:[%s1 + $0x10] sm:$0xff]
      %v231 = vld [vmem:[%s1 + $0x18] sm:$0xff]
      %v232 = vld [vmem:[%s3] sm:$0xff]
      %v233 = vld [vmem:[%s3 + $0x8] sm:$0xff]
      %v234 = vld [vmem:[%s2] sm:$0x1]
      %v235 = vld [vmem:[%s4] sm:$0x1]
      %v236 = vld [vmem:[%s220] sm:$0xff]
      %v237 = vld [vmem:[%s220 + $0x8] sm:$0xff]
      %v238 = vld [vmem:[%s220 + $0x10] sm:$0xff]
      %v239 = vld [vmem:[%s220 + $0x18] sm:$0xff]
      %v240 = vld [vmem:[%s220 + $0x20] sm:$0xff]
      %v241 = vld [vmem:[%s220 + $0x28] sm:$0xff]
      %v242 = vld [vmem:[%s220 + $0x30] sm:$0xff]
      %v243 = vld [vmem:[%s220 + $0x38] sm:$0xff]
      %v244 = vld [vmem:[%s220 + $0x40] sm:$0xff]
      %v245 = vld [vmem:[%s220 + $0x48] sm:$0xff]
      %v246 = vld [vmem:[%s220 + $0x50] sm:$0xff]
      %v247 = vld [vmem:[%s220 + $0x58] sm:$0xff]
      %v248 = vld [vmem:[%s220 + $0x60] sm:$0xff]
      %v249 = vld [vmem:[%s220 + $0x68] sm:$0xff]
      %v250 = vld [vmem:[%s220 + $0x70] sm:$0xff]
      %v251 = vld [vmem:[%s220 + $0x78] sm:$0xff]
      %v252 = vld [vmem:[%s220 + $0x80] sm:$0xff]
      %v253 = vld [vmem:[%s220 + $0x88] sm:$0xff]
      %v254 = vld [vmem:[%s220 + $0x90] sm:$0xff]
      %v255 = vld [vmem:[%s220 + $0x98] sm:$0xff]
      %v256 = vld [vmem:[%s220 + $0xa0] sm:$0xff]
      %v257 = vld [vmem:[%s220 + $0xa8] sm:$0xff]
      %v258 = vld [vmem:[%s220 + $0xb0] sm:$0xff]
      %v259 = vld [vmem:[%s220 + $0xb8] sm:$0xff]
      %v260 = vld [vmem:[%s220 + $0xc0] sm:$0xff]
      %v261 = vld [vmem:[%s220 + $0xc8] sm:$0xff]
      %v262 = vld [vmem:[%s220 + $0xd0] sm:$0xff]
      %v263 = vld [vmem:[%s220 + $0xd8] sm:$0xff]
      %v264 = vld [vmem:[%s220 + $0xe0] sm:$0xff]
      %v265 = vld [vmem:[%s220 + $0xe8] sm:$0xff]
      %v266 = vld [vmem:[%s220 + $0xf0] sm:$0xff]
      %v267 = vld [vmem:[%s220 + $0xf8] sm:$0xff]
      %v268 = vld [vmem:[%s220 + $0x100] sm:$0xff]
      %v269 = vld [vmem:[%s220 + $0x108] sm:$0xff]
      %v270 = vld [vmem:[%s220 + $0x110] sm:$0xff]
      %v271 = vld [vmem:[%s220 + $0x118] sm:$0xff]
      %v272 = vld [vmem:[%s220 + $0x120] sm:$0xff]
      %v273 = vld [vmem:[%s220 + $0x128] sm:$0xff]
      %v274 = vld [vmem:[%s220 + $0x130] sm:$0xff]
      %v275 = vld [vmem:[%s220 + $0x138] sm:$0xff]
      %v276 = vld [vmem:[%s220 + $0x140] sm:$0xff]
      %v277 = vld [vmem:[%s220 + $0x148] sm:$0xff]
      %v278 = vld [vmem:[%s220 + $0x150] sm:$0xff]
      %v279 = vld [vmem:[%s220 + $0x158] sm:$0xff]
      %v280 = vld [vmem:[%s220 + $0x160] sm:$0xff]
      %v281 = vld [vmem:[%s220 + $0x168] sm:$0xff]
      %v282 = vld [vmem:[%s220 + $0x170] sm:$0xff]
      %v283 = vld [vmem:[%s220 + $0x178] sm:$0xff]
      %v284 = vld [vmem:[%s220 + $0x180] sm:$0xff]
      %v285 = vld [vmem:[%s220 + $0x188] sm:$0xff]
      %v286 = vld [vmem:[%s220 + $0x190] sm:$0xff]
      %v287 = vld [vmem:[%s220 + $0x198] sm:$0xff]
      %v288 = vld [vmem:[%s220 + $0x1a0] sm:$0xff]
      %v289 = vld [vmem:[%s220 + $0x1a8] sm:$0xff]
      %v290 = vld [vmem:[%s220 + $0x1b0] sm:$0xff]
      %v291 = vld [vmem:[%s220 + $0x1b8] sm:$0xff]
      %v292 = vld [vmem:[%s220 + $0x1c0] sm:$0xff]
      %v293 = vld [vmem:[%s220 + $0x1c8] sm:$0xff]
      %v294 = vld [vmem:[%s220 + $0x1d0] sm:$0xff]
      %v295 = vld [vmem:[%s220 + $0x1d8] sm:$0xff]
      %v296 = vld [vmem:[%s220 + $0x1e0] sm:$0xff]
      %v297 = vld [vmem:[%s220 + $0x1e8] sm:$0xff]
      %v298 = vld [vmem:[%s220 + $0x1f0] sm:$0xff]
      %v299 = vld [vmem:[%s220 + $0x1f8] sm:$0xff]
      %v301 = vperm.slane %v234, 0
      %vm303 = vcmask 261120
      %v305 = vsel %vm303, %v236, 0
      %v308 = vsel %vm303, %v237, 0
      %v311 = vsel %vm303, %v238, 0
      %v314 = vsel %vm303, %v239, 0
      %v317 = vsel %vm303, %v240, 0
      %v320 = vsel %vm303, %v241, 0
      %v323 = vsel %vm303, %v242, 0
      %v326 = vsel %vm303, %v243, 0
      %v329 = vsel %vm303, %v244, 0
      %v332 = vsel %vm303, %v245, 0
      %v335 = vsel %vm303, %v246, 0
      %v338 = vsel %vm303, %v247, 0
      %v341 = vsel %vm303, %v248, 0
      %v344 = vsel %vm303, %v249, 0
      %v347 = vsel %vm303, %v250, 0
      %v350 = vsel %vm303, %v251, 0
      %v353 = vsel %vm303, %v252, 0
      %v356 = vsel %vm303, %v253, 0
      %v359 = vsel %vm303, %v254, 0
      %v362 = vsel %vm303, %v255, 0
      %v365 = vsel %vm303, %v256, 0
      %v368 = vsel %vm303, %v257, 0
      %v371 = vsel %vm303, %v258, 0
      %v374 = vsel %vm303, %v259, 0
      %v377 = vsel %vm303, %v260, 0
      %v380 = vsel %vm303, %v261, 0
      %v383 = vsel %vm303, %v262, 0
      %v386 = vsel %vm303, %v263, 0
      %v389 = vsel %vm303, %v264, 0
      %v392 = vsel %vm303, %v265, 0
      %v395 = vsel %vm303, %v266, 0
      %v398 = vsel %vm303, %v267, 0
      %v401 = vsel %vm303, %v268, 0
      %v404 = vsel %vm303, %v269, 0
      %v407 = vsel %vm303, %v270, 0
      %v410 = vsel %vm303, %v271, 0
      %v413 = vsel %vm303, %v272, 0
      %v416 = vsel %vm303, %v273, 0
      %v419 = vsel %vm303, %v274, 0
      %v422 = vsel %vm303, %v275, 0
      %v425 = vsel %vm303, %v276, 0
      %v428 = vsel %vm303, %v277, 0
      %v431 = vsel %vm303, %v278, 0
      %v434 = vsel %vm303, %v279, 0
      %v437 = vsel %vm303, %v280, 0
      %v440 = vsel %vm303, %v281, 0
      %v443 = vsel %vm303, %v282, 0
      %v446 = vsel %vm303, %v283, 0
      %v449 = vsel %vm303, %v284, 0
      %v452 = vsel %vm303, %v285, 0
      %v455 = vsel %vm303, %v286, 0
      %v458 = vsel %vm303, %v287, 0
      %v461 = vsel %vm303, %v288, 0
      %v464 = vsel %vm303, %v289, 0
      %v467 = vsel %vm303, %v290, 0
      %v470 = vsel %vm303, %v291, 0
      %v473 = vsel %vm303, %v292, 0
      %v476 = vsel %vm303, %v293, 0
      %v479 = vsel %vm303, %v294, 0
      %v482 = vsel %vm303, %v295, 0
      %v485 = vsel %vm303, %v296, 0
      %v488 = vsel %vm303, %v297, 0
      %v491 = vsel %vm303, %v298, 0
      %v494 = vsel %vm303, %v299, 0
      %v497 = vsel %vm303, %v228, 0
      %v500 = vsel %vm303, %v229, 0
      %v503 = vsel %vm303, %v230, 0
      %v506 = vsel %vm303, %v231, 0
      %508 = vmatpush.xpose.msra.mxu0 0.0
      %509 = vmatpush.xpose.msra.mxu0 0.0
      %510 = vmatpush.xpose.msra.mxu0 0.0
      %511 = vmatpush.xpose.msra.mxu0 0.0
      %512 = vmatpush.xpose.msra.mxu0 0.0
      %513 = vmatpush.xpose.msra.mxu0 0.0
      %514 = vmatpush.xpose.msra.mxu0 0.0
      %515 = vmatpush.xpose.msra.mxu0 0.0
      %516 = vmatpush.xpose.msra.mxu0 0.0
      %517 = vmatpush.xpose.msra.mxu0 0.0
      %518 = vmatpush.xpose.msra.mxu0 0.0
      %519 = vmatpush.xpose.msra.mxu0 0.0
      %520 = vmatpush.xpose.msra.mxu0 %v506
      %521 = vmatpush.xpose.msra.mxu0 %v503
      %522 = vmatpush.xpose.msra.mxu0 %v500
      %523 = vmatpush.xpose.msra.mxu0 %v497
      %524 = vmatmul.f32.gmra.mxu0 %v305
      %v525 = vpop.f32.mrf.mxu0
      %v526 = vadd.f32 %v301, %v525
      %527 = vmatmul.f32.gmra.mxu0 %v308
      %v528 = vpop.f32.mrf.mxu0
      %v529 = vadd.f32 %v301, %v528
      %530 = vmatmul.f32.gmra.mxu0 %v311
      %v531 = vpop.f32.mrf.mxu0
      %v532 = vadd.f32 %v301, %v531
      %533 = vmatmul.f32.gmra.mxu0 %v314
      %v534 = vpop.f32.mrf.mxu0
      %v535 = vadd.f32 %v301, %v534
      %536 = vmatmul.f32.gmra.mxu0 %v317
      %v537 = vpop.f32.mrf.mxu0
      %v538 = vadd.f32 %v301, %v537
      %539 = vmatmul.f32.gmra.mxu0 %v320
      %v540 = vpop.f32.mrf.mxu0
      %v541 = vadd.f32 %v301, %v540
      %542 = vmatmul.f32.gmra.mxu0 %v323
      %v543 = vpop.f32.mrf.mxu0
      %v544 = vadd.f32 %v301, %v543
      %545 = vmatmul.f32.gmra.mxu0 %v326
      %v546 = vpop.f32.mrf.mxu0
      %v547 = vadd.f32 %v301, %v546
      %548 = vmatmul.f32.gmra.mxu0 %v329
      %v549 = vpop.f32.mrf.mxu0
      %v550 = vadd.f32 %v301, %v549
      %551 = vmatmul.f32.gmra.mxu0 %v332
      %v552 = vpop.f32.mrf.mxu0
      %v553 = vadd.f32 %v301, %v552
      %554 = vmatmul.f32.gmra.mxu0 %v335
      %v555 = vpop.f32.mrf.mxu0
      %v556 = vadd.f32 %v301, %v555
      %557 = vmatmul.f32.gmra.mxu0 %v338
      %v558 = vpop.f32.mrf.mxu0
      %v559 = vadd.f32 %v301, %v558
      %560 = vmatmul.f32.gmra.mxu0 %v341
      %v561 = vpop.f32.mrf.mxu0
      %v562 = vadd.f32 %v301, %v561
      %563 = vmatmul.f32.gmra.mxu0 %v344
      %v564 = vpop.f32.mrf.mxu0
      %v565 = vadd.f32 %v301, %v564
      %566 = vmatmul.f32.gmra.mxu0 %v347
      %v567 = vpop.f32.mrf.mxu0
      %v568 = vadd.f32 %v301, %v567
      %569 = vmatmul.f32.gmra.mxu0 %v350
      %v570 = vpop.f32.mrf.mxu0
      %v571 = vadd.f32 %v301, %v570
      %572 = vmatmul.f32.gmra.mxu0 %v353
      %v573 = vpop.f32.mrf.mxu0
      %v574 = vadd.f32 %v301, %v573
      %575 = vmatmul.f32.gmra.mxu0 %v356
      %v576 = vpop.f32.mrf.mxu0
      %v577 = vadd.f32 %v301, %v576
      %578 = vmatmul.f32.gmra.mxu0 %v359
      %v579 = vpop.f32.mrf.mxu0
      %v580 = vadd.f32 %v301, %v579
      %581 = vmatmul.f32.gmra.mxu0 %v362
      %v582 = vpop.f32.mrf.mxu0
      %v583 = vadd.f32 %v301, %v582
      %584 = vmatmul.f32.gmra.mxu0 %v365
      %v585 = vpop.f32.mrf.mxu0
      %v586 = vadd.f32 %v301, %v585
      %587 = vmatmul.f32.gmra.mxu0 %v368
      %v588 = vpop.f32.mrf.mxu0
      %v589 = vadd.f32 %v301, %v588
      %590 = vmatmul.f32.gmra.mxu0 %v371
      %v591 = vpop.f32.mrf.mxu0
      %v592 = vadd.f32 %v301, %v591
      %593 = vmatmul.f32.gmra.mxu0 %v374
      %v594 = vpop.f32.mrf.mxu0
      %v595 = vadd.f32 %v301, %v594
      %596 = vmatmul.f32.gmra.mxu0 %v377
      %v597 = vpop.f32.mrf.mxu0
      %v598 = vadd.f32 %v301, %v597
      %599 = vmatmul.f32.gmra.mxu0 %v380
      %v600 = vpop.f32.mrf.mxu0
      %v601 = vadd.f32 %v301, %v600
      %602 = vmatmul.f32.gmra.mxu0 %v383
      %v603 = vpop.f32.mrf.mxu0
      %v604 = vadd.f32 %v301, %v603
      %605 = vmatmul.f32.gmra.mxu0 %v386
      %v606 = vpop.f32.mrf.mxu0
      %v607 = vadd.f32 %v301, %v606
      %608 = vmatmul.f32.gmra.mxu0 %v389
      %v609 = vpop.f32.mrf.mxu0
      %v610 = vadd.f32 %v301, %v609
      %611 = vmatmul.f32.gmra.mxu0 %v392
      %v612 = vpop.f32.mrf.mxu0
      %v613 = vadd.f32 %v301, %v612
      %614 = vmatmul.f32.gmra.mxu0 %v395
      %v615 = vpop.f32.mrf.mxu0
      %v616 = vadd.f32 %v301, %v615
      %617 = vmatmul.f32.gmra.mxu0 %v398
      %v618 = vpop.f32.mrf.mxu0
      %v619 = vadd.f32 %v301, %v618
      %620 = vmatmul.f32.gmra.mxu0 %v401
      %v621 = vpop.f32.mrf.mxu0
      %v622 = vadd.f32 %v301, %v621
      %623 = vmatmul.f32.gmra.mxu0 %v404
      %v624 = vpop.f32.mrf.mxu0
      %v625 = vadd.f32 %v301, %v624
      %626 = vmatmul.f32.gmra.mxu0 %v407
      %v627 = vpop.f32.mrf.mxu0
      %v628 = vadd.f32 %v301, %v627
      %629 = vmatmul.f32.gmra.mxu0 %v410
      %v630 = vpop.f32.mrf.mxu0
      %v631 = vadd.f32 %v301, %v630
      %632 = vmatmul.f32.gmra.mxu0 %v413
      %v633 = vpop.f32.mrf.mxu0
      %v634 = vadd.f32 %v301, %v633
      %635 = vmatmul.f32.gmra.mxu0 %v416
      %v636 = vpop.f32.mrf.mxu0
      %v637 = vadd.f32 %v301, %v636
      %638 = vmatmul.f32.gmra.mxu0 %v419
      %v639 = vpop.f32.mrf.mxu0
      %v640 = vadd.f32 %v301, %v639
      %641 = vmatmul.f32.gmra.mxu0 %v422
      %v642 = vpop.f32.mrf.mxu0
      %v643 = vadd.f32 %v301, %v642
      %644 = vmatmul.f32.gmra.mxu0 %v425
      %v645 = vpop.f32.mrf.mxu0
      %v646 = vadd.f32 %v301, %v645
      %647 = vmatmul.f32.gmra.mxu0 %v428
      %v648 = vpop.f32.mrf.mxu0
      %v649 = vadd.f32 %v301, %v648
      %650 = vmatmul.f32.gmra.mxu0 %v431
      %v651 = vpop.f32.mrf.mxu0
      %v652 = vadd.f32 %v301, %v651
      %653 = vmatmul.f32.gmra.mxu0 %v434
      %v654 = vpop.f32.mrf.mxu0
      %v655 = vadd.f32 %v301, %v654
      %656 = vmatmul.f32.gmra.mxu0 %v437
      %v657 = vpop.f32.mrf.mxu0
      %v658 = vadd.f32 %v301, %v657
      %659 = vmatmul.f32.gmra.mxu0 %v440
      %v660 = vpop.f32.mrf.mxu0
      %v661 = vadd.f32 %v301, %v660
      %662 = vmatmul.f32.gmra.mxu0 %v443
      %v663 = vpop.f32.mrf.mxu0
      %v664 = vadd.f32 %v301, %v663
      %665 = vmatmul.f32.gmra.mxu0 %v446
      %v666 = vpop.f32.mrf.mxu0
      %v667 = vadd.f32 %v301, %v666
      %668 = vmatmul.f32.gmra.mxu0 %v449
      %v669 = vpop.f32.mrf.mxu0
      %v670 = vadd.f32 %v301, %v669
      %671 = vmatmul.f32.gmra.mxu0 %v452
      %v672 = vpop.f32.mrf.mxu0
      %v673 = vadd.f32 %v301, %v672
      %674 = vmatmul.f32.gmra.mxu0 %v455
      %v675 = vpop.f32.mrf.mxu0
      %v676 = vadd.f32 %v301, %v675
      %677 = vmatmul.f32.gmra.mxu0 %v458
      %v678 = vpop.f32.mrf.mxu0
      %v679 = vadd.f32 %v301, %v678
      %680 = vmatmul.f32.gmra.mxu0 %v461
      %v681 = vpop.f32.mrf.mxu0
      %v682 = vadd.f32 %v301, %v681
      %683 = vmatmul.f32.gmra.mxu0 %v464
      %v684 = vpop.f32.mrf.mxu0
      %v685 = vadd.f32 %v301, %v684
      %686 = vmatmul.f32.gmra.mxu0 %v467
      %v687 = vpop.f32.mrf.mxu0
      %v688 = vadd.f32 %v301, %v687
      %689 = vmatmul.f32.gmra.mxu0 %v470
      %v690 = vpop.f32.mrf.mxu0
      %v691 = vadd.f32 %v301, %v690
      %692 = vmatmul.f32.gmra.mxu0 %v473
      %v693 = vpop.f32.mrf.mxu0
      %v694 = vadd.f32 %v301, %v693
      %695 = vmatmul.f32.gmra.mxu0 %v476
      %v696 = vpop.f32.mrf.mxu0
      %v697 = vadd.f32 %v301, %v696
      %698 = vmatmul.f32.gmra.mxu0 %v479
      %v699 = vpop.f32.mrf.mxu0
      %v700 = vadd.f32 %v301, %v699
      %701 = vmatmul.f32.gmra.mxu0 %v482
      %v702 = vpop.f32.mrf.mxu0
      %v703 = vadd.f32 %v301, %v702
      %704 = vmatmul.f32.gmra.mxu0 %v485
      %v705 = vpop.f32.mrf.mxu0
      %v706 = vadd.f32 %v301, %v705
      %707 = vmatmul.f32.gmra.mxu0 %v488
      %v708 = vpop.f32.mrf.mxu0
      %v709 = vadd.f32 %v301, %v708
      %710 = vmatmul.f32.gmra.mxu0 %v491
      %v711 = vpop.f32.mrf.mxu0
      %v712 = vadd.f32 %v301, %v711
      %713 = vmatmul.f32.gmra.mxu0 %v494
      %v714 = vpop.f32.mrf.mxu0
      %v715 = vadd.f32 %v301, %v714
      %716 = vdwg.mxu0
      %v717 = vmax.f32 %v526, 0.0
      %v718 = vmax.f32 %v529, 0.0
      %v719 = vmax.f32 %v532, 0.0
      %v720 = vmax.f32 %v535, 0.0
      %v721 = vmax.f32 %v538, 0.0
      %v722 = vmax.f32 %v541, 0.0
      %v723 = vmax.f32 %v544, 0.0
      %v724 = vmax.f32 %v547, 0.0
      %v725 = vmax.f32 %v550, 0.0
      %v726 = vmax.f32 %v553, 0.0
      %v727 = vmax.f32 %v556, 0.0
      %v728 = vmax.f32 %v559, 0.0
      %v729 = vmax.f32 %v562, 0.0
      %v730 = vmax.f32 %v565, 0.0
      %v731 = vmax.f32 %v568, 0.0
      %v732 = vmax.f32 %v571, 0.0
      %v733 = vmax.f32 %v574, 0.0
      %v734 = vmax.f32 %v577, 0.0
      %v735 = vmax.f32 %v580, 0.0
      %v736 = vmax.f32 %v583, 0.0
      %v737 = vmax.f32 %v586, 0.0
      %v738 = vmax.f32 %v589, 0.0
      %v739 = vmax.f32 %v592, 0.0
      %v740 = vmax.f32 %v595, 0.0
      %v741 = vmax.f32 %v598, 0.0
      %v742 = vmax.f32 %v601, 0.0
      %v743 = vmax.f32 %v604, 0.0
      %v744 = vmax.f32 %v607, 0.0
      %v745 = vmax.f32 %v610, 0.0
      %v746 = vmax.f32 %v613, 0.0
      %v747 = vmax.f32 %v616, 0.0
      %v748 = vmax.f32 %v619, 0.0
      %v749 = vmax.f32 %v622, 0.0
      %v750 = vmax.f32 %v625, 0.0
      %v751 = vmax.f32 %v628, 0.0
      %v752 = vmax.f32 %v631, 0.0
      %v753 = vmax.f32 %v634, 0.0
      %v754 = vmax.f32 %v637, 0.0
      %v755 = vmax.f32 %v640, 0.0
      %v756 = vmax.f32 %v643, 0.0
      %v757 = vmax.f32 %v646, 0.0
      %v758 = vmax.f32 %v649, 0.0
      %v759 = vmax.f32 %v652, 0.0
      %v760 = vmax.f32 %v655, 0.0
      %v761 = vmax.f32 %v658, 0.0
      %v762 = vmax.f32 %v661, 0.0
      %v763 = vmax.f32 %v664, 0.0
      %v764 = vmax.f32 %v667, 0.0
      %v765 = vmax.f32 %v670, 0.0
      %v766 = vmax.f32 %v673, 0.0
      %v767 = vmax.f32 %v676, 0.0
      %v768 = vmax.f32 %v679, 0.0
      %v769 = vmax.f32 %v682, 0.0
      %v770 = vmax.f32 %v685, 0.0
      %v771 = vmax.f32 %v688, 0.0
      %v772 = vmax.f32 %v691, 0.0
      %v773 = vmax.f32 %v694, 0.0
      %v774 = vmax.f32 %v697, 0.0
      %v775 = vmax.f32 %v700, 0.0
      %v776 = vmax.f32 %v703, 0.0
      %v777 = vmax.f32 %v706, 0.0
      %v778 = vmax.f32 %v709, 0.0
      %v779 = vmax.f32 %v712, 0.0
      %v780 = vmax.f32 %v715, 0.0
      %v782 = vperm.slane %v235, 0
      %v785 = vsel %vm303, %v717, 0
      %v788 = vsel %vm303, %v718, 0
      %v791 = vsel %vm303, %v719, 0
      %v794 = vsel %vm303, %v720, 0
      %v797 = vsel %vm303, %v721, 0
      %v800 = vsel %vm303, %v722, 0
      %v803 = vsel %vm303, %v723, 0
      %v806 = vsel %vm303, %v724, 0
      %v809 = vsel %vm303, %v725, 0
      %v812 = vsel %vm303, %v726, 0
      %v815 = vsel %vm303, %v727, 0
      %v818 = vsel %vm303, %v728, 0
      %v821 = vsel %vm303, %v729, 0
      %v824 = vsel %vm303, %v730, 0
      %v827 = vsel %vm303, %v731, 0
      %v830 = vsel %vm303, %v732, 0
      %v833 = vsel %vm303, %v733, 0
      %v836 = vsel %vm303, %v734, 0
      %v839 = vsel %vm303, %v735, 0
      %v842 = vsel %vm303, %v736, 0
      %v845 = vsel %vm303, %v737, 0
      %v848 = vsel %vm303, %v738, 0
      %v851 = vsel %vm303, %v739, 0
      %v854 = vsel %vm303, %v740, 0
      %v857 = vsel %vm303, %v741, 0
      %v860 = vsel %vm303, %v742, 0
      %v863 = vsel %vm303, %v743, 0
      %v866 = vsel %vm303, %v744, 0
      %v869 = vsel %vm303, %v745, 0
      %v872 = vsel %vm303, %v746, 0
      %v875 = vsel %vm303, %v747, 0
      %v878 = vsel %vm303, %v748, 0
      %v881 = vsel %vm303, %v749, 0
      %v884 = vsel %vm303, %v750, 0
      %v887 = vsel %vm303, %v751, 0
      %v890 = vsel %vm303, %v752, 0
      %v893 = vsel %vm303, %v753, 0
      %v896 = vsel %vm303, %v754, 0
      %v899 = vsel %vm303, %v755, 0
      %v902 = vsel %vm303, %v756, 0
      %v905 = vsel %vm303, %v757, 0
      %v908 = vsel %vm303, %v758, 0
      %v911 = vsel %vm303, %v759, 0
      %v914 = vsel %vm303, %v760, 0
      %v917 = vsel %vm303, %v761, 0
      %v920 = vsel %vm303, %v762, 0
      %v923 = vsel %vm303, %v763, 0
      %v926 = vsel %vm303, %v764, 0
      %v929 = vsel %vm303, %v765, 0
      %v932 = vsel %vm303, %v766, 0
      %v935 = vsel %vm303, %v767, 0
      %v938 = vsel %vm303, %v768, 0
      %v941 = vsel %vm303, %v769, 0
      %v944 = vsel %vm303, %v770, 0
      %v947 = vsel %vm303, %v771, 0
      %v950 = vsel %vm303, %v772, 0
      %v953 = vsel %vm303, %v773, 0
      %v956 = vsel %vm303, %v774, 0
      %v959 = vsel %vm303, %v775, 0
      %v962 = vsel %vm303, %v776, 0
      %v965 = vsel %vm303, %v777, 0
      %v968 = vsel %vm303, %v778, 0
      %v971 = vsel %vm303, %v779, 0
      %v974 = vsel %vm303, %v780, 0
      %v977 = vsel %vm303, %v232, 0
      %v980 = vsel %vm303, %v233, 0
      %982 = vmatpush.xpose.msra.mxu0 0.0
      %983 = vmatpush.xpose.msra.mxu0 0.0
      %984 = vmatpush.xpose.msra.mxu0 0.0
      %985 = vmatpush.xpose.msra.mxu0 0.0
      %986 = vmatpush.xpose.msra.mxu0 0.0
      %987 = vmatpush.xpose.msra.mxu0 0.0
      %988 = vmatpush.xpose.msra.mxu0 0.0
      %989 = vmatpush.xpose.msra.mxu0 0.0
      %990 = vmatpush.xpose.msra.mxu0 0.0
      %991 = vmatpush.xpose.msra.mxu0 0.0
      %992 = vmatpush.xpose.msra.mxu0 0.0
      %993 = vmatpush.xpose.msra.mxu0 0.0
      %994 = vmatpush.xpose.msra.mxu0 0.0
      %995 = vmatpush.xpose.msra.mxu0 0.0
      %996 = vmatpush.xpose.msra.mxu0 %v980
      %997 = vmatpush.xpose.msra.mxu0 %v977
      %998 = vmatmul.f32.gmra.mxu0 %v785
      %v999 = vpop.f32.mrf.mxu0
      %v1000 = vadd.f32 %v782, %v999
      %1001 = vmatmul.f32.gmra.mxu0 %v788
      %v1002 = vpop.f32.mrf.mxu0
      %v1003 = vadd.f32 %v782, %v1002
      %1004 = vmatmul.f32.gmra.mxu0 %v791
      %v1005 = vpop.f32.mrf.mxu0
      %v1006 = vadd.f32 %v782, %v1005
      %1007 = vmatmul.f32.gmra.mxu0 %v794
      %v1008 = vpop.f32.mrf.mxu0
      %v1009 = vadd.f32 %v782, %v1008
      %1010 = vmatmul.f32.gmra.mxu0 %v797
      %v1011 = vpop.f32.mrf.mxu0
      %v1012 = vadd.f32 %v782, %v1011
      %1013 = vmatmul.f32.gmra.mxu0 %v800
      %v1014 = vpop.f32.mrf.mxu0
      %v1015 = vadd.f32 %v782, %v1014
      %1016 = vmatmul.f32.gmra.mxu0 %v803
      %v1017 = vpop.f32.mrf.mxu0
      %v1018 = vadd.f32 %v782, %v1017
      %1019 = vmatmul.f32.gmra.mxu0 %v806
      %v1020 = vpop.f32.mrf.mxu0
      %v1021 = vadd.f32 %v782, %v1020
      %1022 = vmatmul.f32.gmra.mxu0 %v809
      %v1023 = vpop.f32.mrf.mxu0
      %v1024 = vadd.f32 %v782, %v1023
      %1025 = vmatmul.f32.gmra.mxu0 %v812
      %v1026 = vpop.f32.mrf.mxu0
      %v1027 = vadd.f32 %v782, %v1026
      %1028 = vmatmul.f32.gmra.mxu0 %v815
      %v1029 = vpop.f32.mrf.mxu0
      %v1030 = vadd.f32 %v782, %v1029
      %1031 = vmatmul.f32.gmra.mxu0 %v818
      %v1032 = vpop.f32.mrf.mxu0
      %v1033 = vadd.f32 %v782, %v1032
      %1034 = vmatmul.f32.gmra.mxu0 %v821
      %v1035 = vpop.f32.mrf.mxu0
      %v1036 = vadd.f32 %v782, %v1035
      %1037 = vmatmul.f32.gmra.mxu0 %v824
      %v1038 = vpop.f32.mrf.mxu0
      %v1039 = vadd.f32 %v782, %v1038
      %1040 = vmatmul.f32.gmra.mxu0 %v827
      %v1041 = vpop.f32.mrf.mxu0
      %v1042 = vadd.f32 %v782, %v1041
      %1043 = vmatmul.f32.gmra.mxu0 %v830
      %v1044 = vpop.f32.mrf.mxu0
      %v1045 = vadd.f32 %v782, %v1044
      %1046 = vmatmul.f32.gmra.mxu0 %v833
      %v1047 = vpop.f32.mrf.mxu0
      %v1048 = vadd.f32 %v782, %v1047
      %1049 = vmatmul.f32.gmra.mxu0 %v836
      %v1050 = vpop.f32.mrf.mxu0
      %v1051 = vadd.f32 %v782, %v1050
      %1052 = vmatmul.f32.gmra.mxu0 %v839
      %v1053 = vpop.f32.mrf.mxu0
      %v1054 = vadd.f32 %v782, %v1053
      %1055 = vmatmul.f32.gmra.mxu0 %v842
      %v1056 = vpop.f32.mrf.mxu0
      %v1057 = vadd.f32 %v782, %v1056
      %1058 = vmatmul.f32.gmra.mxu0 %v845
      %v1059 = vpop.f32.mrf.mxu0
      %v1060 = vadd.f32 %v782, %v1059
      %1061 = vmatmul.f32.gmra.mxu0 %v848
      %v1062 = vpop.f32.mrf.mxu0
      %v1063 = vadd.f32 %v782, %v1062
      %1064 = vmatmul.f32.gmra.mxu0 %v851
      %v1065 = vpop.f32.mrf.mxu0
      %v1066 = vadd.f32 %v782, %v1065
      %1067 = vmatmul.f32.gmra.mxu0 %v854
      %v1068 = vpop.f32.mrf.mxu0
      %v1069 = vadd.f32 %v782, %v1068
      %1070 = vmatmul.f32.gmra.mxu0 %v857
      %v1071 = vpop.f32.mrf.mxu0
      %v1072 = vadd.f32 %v782, %v1071
      %1073 = vmatmul.f32.gmra.mxu0 %v860
      %v1074 = vpop.f32.mrf.mxu0
      %v1075 = vadd.f32 %v782, %v1074
      %1076 = vmatmul.f32.gmra.mxu0 %v863
      %v1077 = vpop.f32.mrf.mxu0
      %v1078 = vadd.f32 %v782, %v1077
      %1079 = vmatmul.f32.gmra.mxu0 %v866
      %v1080 = vpop.f32.mrf.mxu0
      %v1081 = vadd.f32 %v782, %v1080
      %1082 = vmatmul.f32.gmra.mxu0 %v869
      %v1083 = vpop.f32.mrf.mxu0
      %v1084 = vadd.f32 %v782, %v1083
      %1085 = vmatmul.f32.gmra.mxu0 %v872
      %v1086 = vpop.f32.mrf.mxu0
      %v1087 = vadd.f32 %v782, %v1086
      %1088 = vmatmul.f32.gmra.mxu0 %v875
      %v1089 = vpop.f32.mrf.mxu0
      %v1090 = vadd.f32 %v782, %v1089
      %1091 = vmatmul.f32.gmra.mxu0 %v878
      %v1092 = vpop.f32.mrf.mxu0
      %v1093 = vadd.f32 %v782, %v1092
      %1094 = vmatmul.f32.gmra.mxu0 %v881
      %v1095 = vpop.f32.mrf.mxu0
      %v1096 = vadd.f32 %v782, %v1095
      %1097 = vmatmul.f32.gmra.mxu0 %v884
      %v1098 = vpop.f32.mrf.mxu0
      %v1099 = vadd.f32 %v782, %v1098
      %1100 = vmatmul.f32.gmra.mxu0 %v887
      %v1101 = vpop.f32.mrf.mxu0
      %v1102 = vadd.f32 %v782, %v1101
      %1103 = vmatmul.f32.gmra.mxu0 %v890
      %v1104 = vpop.f32.mrf.mxu0
      %v1105 = vadd.f32 %v782, %v1104
      %1106 = vmatmul.f32.gmra.mxu0 %v893
      %v1107 = vpop.f32.mrf.mxu0
      %v1108 = vadd.f32 %v782, %v1107
      %1109 = vmatmul.f32.gmra.mxu0 %v896
      %v1110 = vpop.f32.mrf.mxu0
      %v1111 = vadd.f32 %v782, %v1110
      %1112 = vmatmul.f32.gmra.mxu0 %v899
      %v1113 = vpop.f32.mrf.mxu0
      %v1114 = vadd.f32 %v782, %v1113
      %1115 = vmatmul.f32.gmra.mxu0 %v902
      %v1116 = vpop.f32.mrf.mxu0
      %v1117 = vadd.f32 %v782, %v1116
      %1118 = vmatmul.f32.gmra.mxu0 %v905
      %v1119 = vpop.f32.mrf.mxu0
      %v1120 = vadd.f32 %v782, %v1119
      %1121 = vmatmul.f32.gmra.mxu0 %v908
      %v1122 = vpop.f32.mrf.mxu0
      %v1123 = vadd.f32 %v782, %v1122
      %1124 = vmatmul.f32.gmra.mxu0 %v911
      %v1125 = vpop.f32.mrf.mxu0
      %v1126 = vadd.f32 %v782, %v1125
      %1127 = vmatmul.f32.gmra.mxu0 %v914
      %v1128 = vpop.f32.mrf.mxu0
      %v1129 = vadd.f32 %v782, %v1128
      %1130 = vmatmul.f32.gmra.mxu0 %v917
      %v1131 = vpop.f32.mrf.mxu0
      %v1132 = vadd.f32 %v782, %v1131
      %1133 = vmatmul.f32.gmra.mxu0 %v920
      %v1134 = vpop.f32.mrf.mxu0
      %v1135 = vadd.f32 %v782, %v1134
      %1136 = vmatmul.f32.gmra.mxu0 %v923
      %v1137 = vpop.f32.mrf.mxu0
      %v1138 = vadd.f32 %v782, %v1137
      %1139 = vmatmul.f32.gmra.mxu0 %v926
      %v1140 = vpop.f32.mrf.mxu0
      %v1141 = vadd.f32 %v782, %v1140
      %1142 = vmatmul.f32.gmra.mxu0 %v929
      %v1143 = vpop.f32.mrf.mxu0
      %v1144 = vadd.f32 %v782, %v1143
      %1145 = vmatmul.f32.gmra.mxu0 %v932
      %v1146 = vpop.f32.mrf.mxu0
      %v1147 = vadd.f32 %v782, %v1146
      %1148 = vmatmul.f32.gmra.mxu0 %v935
      %v1149 = vpop.f32.mrf.mxu0
      %v1150 = vadd.f32 %v782, %v1149
      %1151 = vmatmul.f32.gmra.mxu0 %v938
      %v1152 = vpop.f32.mrf.mxu0
      %v1153 = vadd.f32 %v782, %v1152
      %1154 = vmatmul.f32.gmra.mxu0 %v941
      %v1155 = vpop.f32.mrf.mxu0
      %v1156 = vadd.f32 %v782, %v1155
      %1157 = vmatmul.f32.gmra.mxu0 %v944
      %v1158 = vpop.f32.mrf.mxu0
      %v1159 = vadd.f32 %v782, %v1158
      %1160 = vmatmul.f32.gmra.mxu0 %v947
      %v1161 = vpop.f32.mrf.mxu0
      %v1162 = vadd.f32 %v782, %v1161
      %1163 = vmatmul.f32.gmra.mxu0 %v950
      %v1164 = vpop.f32.mrf.mxu0
      %v1165 = vadd.f32 %v782, %v1164
      %1166 = vmatmul.f32.gmra.mxu0 %v953
      %v1167 = vpop.f32.mrf.mxu0
      %v1168 = vadd.f32 %v782, %v1167
      %1169 = vmatmul.f32.gmra.mxu0 %v956
      %v1170 = vpop.f32.mrf.mxu0
      %v1171 = vadd.f32 %v782, %v1170
      %1172 = vmatmul.f32.gmra.mxu0 %v959
      %v1173 = vpop.f32.mrf.mxu0
      %v1174 = vadd.f32 %v782, %v1173
      %1175 = vmatmul.f32.gmra.mxu0 %v962
      %v1176 = vpop.f32.mrf.mxu0
      %v1177 = vadd.f32 %v782, %v1176
      %1178 = vmatmul.f32.gmra.mxu0 %v965
      %v1179 = vpop.f32.mrf.mxu0
      %v1180 = vadd.f32 %v782, %v1179
      %1181 = vmatmul.f32.gmra.mxu0 %v968
      %v1182 = vpop.f32.mrf.mxu0
      %v1183 = vadd.f32 %v782, %v1182
      %1184 = vmatmul.f32.gmra.mxu0 %v971
      %v1185 = vpop.f32.mrf.mxu0
      %v1186 = vadd.f32 %v782, %v1185
      %1187 = vmatmul.f32.gmra.mxu0 %v974
      %v1188 = vpop.f32.mrf.mxu0
      %v1189 = vadd.f32 %v782, %v1188
      %1190 = vdwg.mxu0
      %vm1191 = vcmask 130048
      %v1192 = vsel %vm1191, %v1000, -inf
      %1193 = vmax.xlane.f32.xlu0 %v1192
      %v1194 = vpop.xlane.xlu0 %1193
      %v1195 = vsel %vm1191, %v1003, -inf
      %1196 = vmax.xlane.f32.xlu0 %v1195
      %v1197 = vpop.xlane.xlu0 %1196
      %v1198 = vsel %vm1191, %v1006, -inf
      %1199 = vmax.xlane.f32.xlu0 %v1198
      %v1200 = vpop.xlane.xlu0 %1199
      %v1201 = vsel %vm1191, %v1009, -inf
      %1202 = vmax.xlane.f32.xlu0 %v1201
      %v1203 = vpop.xlane.xlu0 %1202
      %v1204 = vsel %vm1191, %v1012, -inf
      %1205 = vmax.xlane.f32.xlu0 %v1204
      %v1206 = vpop.xlane.xlu0 %1205
      %v1207 = vsel %vm1191, %v1015, -inf
      %1208 = vmax.xlane.f32.xlu0 %v1207
      %v1209 = vpop.xlane.xlu0 %1208
      %v1210 = vsel %vm1191, %v1018, -inf
      %1211 = vmax.xlane.f32.xlu0 %v1210
      %v1212 = vpop.xlane.xlu0 %1211
      %v1213 = vsel %vm1191, %v1021, -inf
      %1214 = vmax.xlane.f32.xlu0 %v1213
      %v1215 = vpop.xlane.xlu0 %1214
      %v1216 = vsel %vm1191, %v1024, -inf
      %1217 = vmax.xlane.f32.xlu0 %v1216
      %v1218 = vpop.xlane.xlu0 %1217
      %v1219 = vsel %vm1191, %v1027, -inf
      %1220 = vmax.xlane.f32.xlu0 %v1219
      %v1221 = vpop.xlane.xlu0 %1220
      %v1222 = vsel %vm1191, %v1030, -inf
      %1223 = vmax.xlane.f32.xlu0 %v1222
      %v1224 = vpop.xlane.xlu0 %1223
      %v1225 = vsel %vm1191, %v1033, -inf
      %1226 = vmax.xlane.f32.xlu0 %v1225
      %v1227 = vpop.xlane.xlu0 %1226
      %v1228 = vsel %vm1191, %v1036, -inf
      %1229 = vmax.xlane.f32.xlu0 %v1228
      %v1230 = vpop.xlane.xlu0 %1229
      %v1231 = vsel %vm1191, %v1039, -inf
      %1232 = vmax.xlane.f32.xlu0 %v1231
      %v1233 = vpop.xlane.xlu0 %1232
      %v1234 = vsel %vm1191, %v1042, -inf
      %1235 = vmax.xlane.f32.xlu0 %v1234
      %v1236 = vpop.xlane.xlu0 %1235
      %v1237 = vsel %vm1191, %v1045, -inf
      %1238 = vmax.xlane.f32.xlu0 %v1237
      %v1239 = vpop.xlane.xlu0 %1238
      %v1240 = vsel %vm1191, %v1048, -inf
      %1241 = vmax.xlane.f32.xlu0 %v1240
      %v1242 = vpop.xlane.xlu0 %1241
      %v1243 = vsel %vm1191, %v1051, -inf
      %1244 = vmax.xlane.f32.xlu0 %v1243
      %v1245 = vpop.xlane.xlu0 %1244
      %v1246 = vsel %vm1191, %v1054, -inf
      %1247 = vmax.xlane.f32.xlu0 %v1246
      %v1248 = vpop.xlane.xlu0 %1247
      %v1249 = vsel %vm1191, %v1057, -inf
      %1250 = vmax.xlane.f32.xlu0 %v1249
      %v1251 = vpop.xlane.xlu0 %1250
      %v1252 = vsel %vm1191, %v1060, -inf
      %1253 = vmax.xlane.f32.xlu0 %v1252
      %v1254 = vpop.xlane.xlu0 %1253
      %v1255 = vsel %vm1191, %v1063, -inf
      %1256 = vmax.xlane.f32.xlu0 %v1255
      %v1257 = vpop.xlane.xlu0 %1256
      %v1258 = vsel %vm1191, %v1066, -inf
      %1259 = vmax.xlane.f32.xlu0 %v1258
      %v1260 = vpop.xlane.xlu0 %1259
      %v1261 = vsel %vm1191, %v1069, -inf
      %1262 = vmax.xlane.f32.xlu0 %v1261
      %v1263 = vpop.xlane.xlu0 %1262
      %v1264 = vsel %vm1191, %v1072, -inf
      %1265 = vmax.xlane.f32.xlu0 %v1264
      %v1266 = vpop.xlane.xlu0 %1265
      %v1267 = vsel %vm1191, %v1075, -inf
      %1268 = vmax.xlane.f32.xlu0 %v1267
      %v1269 = vpop.xlane.xlu0 %1268
      %v1270 = vsel %vm1191, %v1078, -inf
      %1271 = vmax.xlane.f32.xlu0 %v1270
      %v1272 = vpop.xlane.xlu0 %1271
      %v1273 = vsel %vm1191, %v1081, -inf
      %1274 = vmax.xlane.f32.xlu0 %v1273
      %v1275 = vpop.xlane.xlu0 %1274
      %v1276 = vsel %vm1191, %v1084, -inf
      %1277 = vmax.xlane.f32.xlu0 %v1276
      %v1278 = vpop.xlane.xlu0 %1277
      %v1279 = vsel %vm1191, %v1087, -inf
      %1280 = vmax.xlane.f32.xlu0 %v1279
      %v1281 = vpop.xlane.xlu0 %1280
      %v1282 = vsel %vm1191, %v1090, -inf
      %1283 = vmax.xlane.f32.xlu0 %v1282
      %v1284 = vpop.xlane.xlu0 %1283
      %v1285 = vsel %vm1191, %v1093, -inf
      %1286 = vmax.xlane.f32.xlu0 %v1285
      %v1287 = vpop.xlane.xlu0 %1286
      %v1288 = vsel %vm1191, %v1096, -inf
      %1289 = vmax.xlane.f32.xlu0 %v1288
      %v1290 = vpop.xlane.xlu0 %1289
      %v1291 = vsel %vm1191, %v1099, -inf
      %1292 = vmax.xlane.f32.xlu0 %v1291
      %v1293 = vpop.xlane.xlu0 %1292
      %v1294 = vsel %vm1191, %v1102, -inf
      %1295 = vmax.xlane.f32.xlu0 %v1294
      %v1296 = vpop.xlane.xlu0 %1295
      %v1297 = vsel %vm1191, %v1105, -inf
      %1298 = vmax.xlane.f32.xlu0 %v1297
      %v1299 = vpop.xlane.xlu0 %1298
      %v1300 = vsel %vm1191, %v1108, -inf
      %1301 = vmax.xlane.f32.xlu0 %v1300
      %v1302 = vpop.xlane.xlu0 %1301
      %v1303 = vsel %vm1191, %v1111, -inf
      %1304 = vmax.xlane.f32.xlu0 %v1303
      %v1305 = vpop.xlane.xlu0 %1304
      %v1306 = vsel %vm1191, %v1114, -inf
      %1307 = vmax.xlane.f32.xlu0 %v1306
      %v1308 = vpop.xlane.xlu0 %1307
      %v1309 = vsel %vm1191, %v1117, -inf
      %1310 = vmax.xlane.f32.xlu0 %v1309
      %v1311 = vpop.xlane.xlu0 %1310
      %v1312 = vsel %vm1191, %v1120, -inf
      %1313 = vmax.xlane.f32.xlu0 %v1312
      %v1314 = vpop.xlane.xlu0 %1313
      %v1315 = vsel %vm1191, %v1123, -inf
      %1316 = vmax.xlane.f32.xlu0 %v1315
      %v1317 = vpop.xlane.xlu0 %1316
      %v1318 = vsel %vm1191, %v1126, -inf
      %1319 = vmax.xlane.f32.xlu0 %v1318
      %v1320 = vpop.xlane.xlu0 %1319
      %v1321 = vsel %vm1191, %v1129, -inf
      %1322 = vmax.xlane.f32.xlu0 %v1321
      %v1323 = vpop.xlane.xlu0 %1322
      %v1324 = vsel %vm1191, %v1132, -inf
      %1325 = vmax.xlane.f32.xlu0 %v1324
      %v1326 = vpop.xlane.xlu0 %1325
      %v1327 = vsel %vm1191, %v1135, -inf
      %1328 = vmax.xlane.f32.xlu0 %v1327
      %v1329 = vpop.xlane.xlu0 %1328
      %v1330 = vsel %vm1191, %v1138, -inf
      %1331 = vmax.xlane.f32.xlu0 %v1330
      %v1332 = vpop.xlane.xlu0 %1331
      %v1333 = vsel %vm1191, %v1141, -inf
      %1334 = vmax.xlane.f32.xlu0 %v1333
      %v1335 = vpop.xlane.xlu0 %1334
      %v1336 = vsel %vm1191, %v1144, -inf
      %1337 = vmax.xlane.f32.xlu0 %v1336
      %v1338 = vpop.xlane.xlu0 %1337
      %v1339 = vsel %vm1191, %v1147, -inf
      %1340 = vmax.xlane.f32.xlu0 %v1339
      %v1341 = vpop.xlane.xlu0 %1340
      %v1342 = vsel %vm1191, %v1150, -inf
      %1343 = vmax.xlane.f32.xlu0 %v1342
      %v1344 = vpop.xlane.xlu0 %1343
      %v1345 = vsel %vm1191, %v1153, -inf
      %1346 = vmax.xlane.f32.xlu0 %v1345
      %v1347 = vpop.xlane.xlu0 %1346
      %v1348 = vsel %vm1191, %v1156, -inf
      %1349 = vmax.xlane.f32.xlu0 %v1348
      %v1350 = vpop.xlane.xlu0 %1349
      %v1351 = vsel %vm1191, %v1159, -inf
      %1352 = vmax.xlane.f32.xlu0 %v1351
      %v1353 = vpop.xlane.xlu0 %1352
      %v1354 = vsel %vm1191, %v1162, -inf
      %1355 = vmax.xlane.f32.xlu0 %v1354
      %v1356 = vpop.xlane.xlu0 %1355
      %v1357 = vsel %vm1191, %v1165, -inf
      %1358 = vmax.xlane.f32.xlu0 %v1357
      %v1359 = vpop.xlane.xlu0 %1358
      %v1360 = vsel %vm1191, %v1168, -inf
      %1361 = vmax.xlane.f32.xlu0 %v1360
      %v1362 = vpop.xlane.xlu0 %1361
      %v1363 = vsel %vm1191, %v1171, -inf
      %1364 = vmax.xlane.f32.xlu0 %v1363
      %v1365 = vpop.xlane.xlu0 %1364
      %v1366 = vsel %vm1191, %v1174, -inf
      %1367 = vmax.xlane.f32.xlu0 %v1366
      %v1368 = vpop.xlane.xlu0 %1367
      %v1369 = vsel %vm1191, %v1177, -inf
      %1370 = vmax.xlane.f32.xlu0 %v1369
      %v1371 = vpop.xlane.xlu0 %1370
      %v1372 = vsel %vm1191, %v1180, -inf
      %1373 = vmax.xlane.f32.xlu0 %v1372
      %v1374 = vpop.xlane.xlu0 %1373
      %v1375 = vsel %vm1191, %v1183, -inf
      %1376 = vmax.xlane.f32.xlu0 %v1375
      %v1377 = vpop.xlane.xlu0 %1376
      %v1378 = vsel %vm1191, %v1186, -inf
      %1379 = vmax.xlane.f32.xlu0 %v1378
      %v1380 = vpop.xlane.xlu0 %1379
      %v1381 = vsel %vm1191, %v1189, -inf
      %1382 = vmax.xlane.f32.xlu0 %v1381
      %v1383 = vpop.xlane.xlu0 %1382
      %v1384 = vsub.f32 %v1000, %v1194
      %v1385 = vsub.f32 %v1003, %v1197
      %v1386 = vsub.f32 %v1006, %v1200
      %v1387 = vsub.f32 %v1009, %v1203
      %v1388 = vsub.f32 %v1012, %v1206
      %v1389 = vsub.f32 %v1015, %v1209
      %v1390 = vsub.f32 %v1018, %v1212
      %v1391 = vsub.f32 %v1021, %v1215
      %v1392 = vsub.f32 %v1024, %v1218
      %v1393 = vsub.f32 %v1027, %v1221
      %v1394 = vsub.f32 %v1030, %v1224
      %v1395 = vsub.f32 %v1033, %v1227
      %v1396 = vsub.f32 %v1036, %v1230
      %v1397 = vsub.f32 %v1039, %v1233
      %v1398 = vsub.f32 %v1042, %v1236
      %v1399 = vsub.f32 %v1045, %v1239
      %v1400 = vsub.f32 %v1048, %v1242
      %v1401 = vsub.f32 %v1051, %v1245
      %v1402 = vsub.f32 %v1054, %v1248
      %v1403 = vsub.f32 %v1057, %v1251
      %v1404 = vsub.f32 %v1060, %v1254
      %v1405 = vsub.f32 %v1063, %v1257
      %v1406 = vsub.f32 %v1066, %v1260
      %v1407 = vsub.f32 %v1069, %v1263
      %v1408 = vsub.f32 %v1072, %v1266
      %v1409 = vsub.f32 %v1075, %v1269
      %v1410 = vsub.f32 %v1078, %v1272
      %v1411 = vsub.f32 %v1081, %v1275
      %v1412 = vsub.f32 %v1084, %v1278
      %v1413 = vsub.f32 %v1087, %v1281
      %v1414 = vsub.f32 %v1090, %v1284
      %v1415 = vsub.f32 %v1093, %v1287
      %v1416 = vsub.f32 %v1096, %v1290
      %v1417 = vsub.f32 %v1099, %v1293
      %v1418 = vsub.f32 %v1102, %v1296
      %v1419 = vsub.f32 %v1105, %v1299
      %v1420 = vsub.f32 %v1108, %v1302
      %v1421 = vsub.f32 %v1111, %v1305
      %v1422 = vsub.f32 %v1114, %v1308
      %v1423 = vsub.f32 %v1117, %v1311
      %v1424 = vsub.f32 %v1120, %v1314
      %v1425 = vsub.f32 %v1123, %v1317
      %v1426 = vsub.f32 %v1126, %v1320
      %v1427 = vsub.f32 %v1129, %v1323
      %v1428 = vsub.f32 %v1132, %v1326
      %v1429 = vsub.f32 %v1135, %v1329
      %v1430 = vsub.f32 %v1138, %v1332
      %v1431 = vsub.f32 %v1141, %v1335
      %v1432 = vsub.f32 %v1144, %v1338
      %v1433 = vsub.f32 %v1147, %v1341
      %v1434 = vsub.f32 %v1150, %v1344
      %v1435 = vsub.f32 %v1153, %v1347
      %v1436 = vsub.f32 %v1156, %v1350
      %v1437 = vsub.f32 %v1159, %v1353
      %v1438 = vsub.f32 %v1162, %v1356
      %v1439 = vsub.f32 %v1165, %v1359
      %v1440 = vsub.f32 %v1168, %v1362
      %v1441 = vsub.f32 %v1171, %v1365
      %v1442 = vsub.f32 %v1174, %v1368
      %v1443 = vsub.f32 %v1177, %v1371
      %v1444 = vsub.f32 %v1180, %v1374
      %v1445 = vsub.f32 %v1183, %v1377
      %v1446 = vsub.f32 %v1186, %v1380
      %v1447 = vsub.f32 %v1189, %v1383
      %v1448 = vmul.f32 %v1384, 1.442695
      %v1449 = vpow.pop %v1448
      %v1450 = vmul.f32 %v1385, 1.442695
      %v1451 = vpow.pop %v1450
      %v1452 = vmul.f32 %v1386, 1.442695
      %v1453 = vpow.pop %v1452
      %v1454 = vmul.f32 %v1387, 1.442695
      %v1455 = vpow.pop %v1454
      %v1456 = vmul.f32 %v1388, 1.442695
      %v1457 = vpow.pop %v1456
      %v1458 = vmul.f32 %v1389, 1.442695
      %v1459 = vpow.pop %v1458
      %v1460 = vmul.f32 %v1390, 1.442695
      %v1461 = vpow.pop %v1460
      %v1462 = vmul.f32 %v1391, 1.442695
      %v1463 = vpow.pop %v1462
      %v1464 = vmul.f32 %v1392, 1.442695
      %v1465 = vpow.pop %v1464
      %v1466 = vmul.f32 %v1393, 1.442695
      %v1467 = vpow.pop %v1466
      %v1468 = vmul.f32 %v1394, 1.442695
      %v1469 = vpow.pop %v1468
      %v1470 = vmul.f32 %v1395, 1.442695
      %v1471 = vpow.pop %v1470
      %v1472 = vmul.f32 %v1396, 1.442695
      %v1473 = vpow.pop %v1472
      %v1474 = vmul.f32 %v1397, 1.442695
      %v1475 = vpow.pop %v1474
      %v1476 = vmul.f32 %v1398, 1.442695
      %v1477 = vpow.pop %v1476
      %v1478 = vmul.f32 %v1399, 1.442695
      %v1479 = vpow.pop %v1478
      %v1480 = vmul.f32 %v1400, 1.442695
      %v1481 = vpow.pop %v1480
      %v1482 = vmul.f32 %v1401, 1.442695
      %v1483 = vpow.pop %v1482
      %v1484 = vmul.f32 %v1402, 1.442695
      %v1485 = vpow.pop %v1484
      %v1486 = vmul.f32 %v1403, 1.442695
      %v1487 = vpow.pop %v1486
      %v1488 = vmul.f32 %v1404, 1.442695
      %v1489 = vpow.pop %v1488
      %v1490 = vmul.f32 %v1405, 1.442695
      %v1491 = vpow.pop %v1490
      %v1492 = vmul.f32 %v1406, 1.442695
      %v1493 = vpow.pop %v1492
      %v1494 = vmul.f32 %v1407, 1.442695
      %v1495 = vpow.pop %v1494
      %v1496 = vmul.f32 %v1408, 1.442695
      %v1497 = vpow.pop %v1496
      %v1498 = vmul.f32 %v1409, 1.442695
      %v1499 = vpow.pop %v1498
      %v1500 = vmul.f32 %v1410, 1.442695
      %v1501 = vpow.pop %v1500
      %v1502 = vmul.f32 %v1411, 1.442695
      %v1503 = vpow.pop %v1502
      %v1504 = vmul.f32 %v1412, 1.442695
      %v1505 = vpow.pop %v1504
      %v1506 = vmul.f32 %v1413, 1.442695
      %v1507 = vpow.pop %v1506
      %v1508 = vmul.f32 %v1414, 1.442695
      %v1509 = vpow.pop %v1508
      %v1510 = vmul.f32 %v1415, 1.442695
      %v1511 = vpow.pop %v1510
      %v1512 = vmul.f32 %v1416, 1.442695
      %v1513 = vpow.pop %v1512
      %v1514 = vmul.f32 %v1417, 1.442695
      %v1515 = vpow.pop %v1514
      %v1516 = vmul.f32 %v1418, 1.442695
      %v1517 = vpow.pop %v1516
      %v1518 = vmul.f32 %v1419, 1.442695
      %v1519 = vpow.pop %v1518
      %v1520 = vmul.f32 %v1420, 1.442695
      %v1521 = vpow.pop %v1520
      %v1522 = vmul.f32 %v1421, 1.442695
      %v1523 = vpow.pop %v1522
      %v1524 = vmul.f32 %v1422, 1.442695
      %v1525 = vpow.pop %v1524
      %v1526 = vmul.f32 %v1423, 1.442695
      %v1527 = vpow.pop %v1526
      %v1528 = vmul.f32 %v1424, 1.442695
      %v1529 = vpow.pop %v1528
      %v1530 = vmul.f32 %v1425, 1.442695
      %v1531 = vpow.pop %v1530
      %v1532 = vmul.f32 %v1426, 1.442695
      %v1533 = vpow.pop %v1532
      %v1534 = vmul.f32 %v1427, 1.442695
      %v1535 = vpow.pop %v1534
      %v1536 = vmul.f32 %v1428, 1.442695
      %v1537 = vpow.pop %v1536
      %v1538 = vmul.f32 %v1429, 1.442695
      %v1539 = vpow.pop %v1538
      %v1540 = vmul.f32 %v1430, 1.442695
      %v1541 = vpow.pop %v1540
      %v1542 = vmul.f32 %v1431, 1.442695
      %v1543 = vpow.pop %v1542
      %v1544 = vmul.f32 %v1432, 1.442695
      %v1545 = vpow.pop %v1544
      %v1546 = vmul.f32 %v1433, 1.442695
      %v1547 = vpow.pop %v1546
      %v1548 = vmul.f32 %v1434, 1.442695
      %v1549 = vpow.pop %v1548
      %v1550 = vmul.f32 %v1435, 1.442695
      %v1551 = vpow.pop %v1550
      %v1552 = vmul.f32 %v1436, 1.442695
      %v1553 = vpow.pop %v1552
      %v1554 = vmul.f32 %v1437, 1.442695
      %v1555 = vpow.pop %v1554
      %v1556 = vmul.f32 %v1438, 1.442695
      %v1557 = vpow.pop %v1556
      %v1558 = vmul.f32 %v1439, 1.442695
      %v1559 = vpow.pop %v1558
      %v1560 = vmul.f32 %v1440, 1.442695
      %v1561 = vpow.pop %v1560
      %v1562 = vmul.f32 %v1441, 1.442695
      %v1563 = vpow.pop %v1562
      %v1564 = vmul.f32 %v1442, 1.442695
      %v1565 = vpow.pop %v1564
      %v1566 = vmul.f32 %v1443, 1.442695
      %v1567 = vpow.pop %v1566
      %v1568 = vmul.f32 %v1444, 1.442695
      %v1569 = vpow.pop %v1568
      %v1570 = vmul.f32 %v1445, 1.442695
      %v1571 = vpow.pop %v1570
      %v1572 = vmul.f32 %v1446, 1.442695
      %v1573 = vpow.pop %v1572
      %v1574 = vmul.f32 %v1447, 1.442695
      %v1575 = vpow.pop %v1574
      %v1576 = vsel %vm1191, %v1449, 0.0
      %1577 = vadd.xlane.f32.xlu0 %v1576
      %v1578 = vpop.xlane.xlu0 %1577
      %v1579 = vsel %vm1191, %v1451, 0.0
      %1580 = vadd.xlane.f32.xlu0 %v1579
      %v1581 = vpop.xlane.xlu0 %1580
      %v1582 = vsel %vm1191, %v1453, 0.0
      %1583 = vadd.xlane.f32.xlu0 %v1582
      %v1584 = vpop.xlane.xlu0 %1583
      %v1585 = vsel %vm1191, %v1455, 0.0
      %1586 = vadd.xlane.f32.xlu0 %v1585
      %v1587 = vpop.xlane.xlu0 %1586
      %v1588 = vsel %vm1191, %v1457, 0.0
      %1589 = vadd.xlane.f32.xlu0 %v1588
      %v1590 = vpop.xlane.xlu0 %1589
      %v1591 = vsel %vm1191, %v1459, 0.0
      %1592 = vadd.xlane.f32.xlu0 %v1591
      %v1593 = vpop.xlane.xlu0 %1592
      %v1594 = vsel %vm1191, %v1461, 0.0
      %1595 = vadd.xlane.f32.xlu0 %v1594
      %v1596 = vpop.xlane.xlu0 %1595
      %v1597 = vsel %vm1191, %v1463, 0.0
      %1598 = vadd.xlane.f32.xlu0 %v1597
      %v1599 = vpop.xlane.xlu0 %1598
      %v1600 = vsel %vm1191, %v1465, 0.0
      %1601 = vadd.xlane.f32.xlu0 %v1600
      %v1602 = vpop.xlane.xlu0 %1601
      %v1603 = vsel %vm1191, %v1467, 0.0
      %1604 = vadd.xlane.f32.xlu0 %v1603
      %v1605 = vpop.xlane.xlu0 %1604
      %v1606 = vsel %vm1191, %v1469, 0.0
      %1607 = vadd.xlane.f32.xlu0 %v1606
      %v1608 = vpop.xlane.xlu0 %1607
      %v1609 = vsel %vm1191, %v1471, 0.0
      %1610 = vadd.xlane.f32.xlu0 %v1609
      %v1611 = vpop.xlane.xlu0 %1610
      %v1612 = vsel %vm1191, %v1473, 0.0
      %1613 = vadd.xlane.f32.xlu0 %v1612
      %v1614 = vpop.xlane.xlu0 %1613
      %v1615 = vsel %vm1191, %v1475, 0.0
      %1616 = vadd.xlane.f32.xlu0 %v1615
      %v1617 = vpop.xlane.xlu0 %1616
      %v1618 = vsel %vm1191, %v1477, 0.0
      %1619 = vadd.xlane.f32.xlu0 %v1618
      %v1620 = vpop.xlane.xlu0 %1619
      %v1621 = vsel %vm1191, %v1479, 0.0
      %1622 = vadd.xlane.f32.xlu0 %v1621
      %v1623 = vpop.xlane.xlu0 %1622
      %v1624 = vsel %vm1191, %v1481, 0.0
      %1625 = vadd.xlane.f32.xlu0 %v1624
      %v1626 = vpop.xlane.xlu0 %1625
      %v1627 = vsel %vm1191, %v1483, 0.0
      %1628 = vadd.xlane.f32.xlu0 %v1627
      %v1629 = vpop.xlane.xlu0 %1628
      %v1630 = vsel %vm1191, %v1485, 0.0
      %1631 = vadd.xlane.f32.xlu0 %v1630
      %v1632 = vpop.xlane.xlu0 %1631
      %v1633 = vsel %vm1191, %v1487, 0.0
      %1634 = vadd.xlane.f32.xlu0 %v1633
      %v1635 = vpop.xlane.xlu0 %1634
      %v1636 = vsel %vm1191, %v1489, 0.0
      %1637 = vadd.xlane.f32.xlu0 %v1636
      %v1638 = vpop.xlane.xlu0 %1637
      %v1639 = vsel %vm1191, %v1491, 0.0
      %1640 = vadd.xlane.f32.xlu0 %v1639
      %v1641 = vpop.xlane.xlu0 %1640
      %v1642 = vsel %vm1191, %v1493, 0.0
      %1643 = vadd.xlane.f32.xlu0 %v1642
      %v1644 = vpop.xlane.xlu0 %1643
      %v1645 = vsel %vm1191, %v1495, 0.0
      %1646 = vadd.xlane.f32.xlu0 %v1645
      %v1647 = vpop.xlane.xlu0 %1646
      %v1648 = vsel %vm1191, %v1497, 0.0
      %1649 = vadd.xlane.f32.xlu0 %v1648
      %v1650 = vpop.xlane.xlu0 %1649
      %v1651 = vsel %vm1191, %v1499, 0.0
      %1652 = vadd.xlane.f32.xlu0 %v1651
      %v1653 = vpop.xlane.xlu0 %1652
      %v1654 = vsel %vm1191, %v1501, 0.0
      %1655 = vadd.xlane.f32.xlu0 %v1654
      %v1656 = vpop.xlane.xlu0 %1655
      %v1657 = vsel %vm1191, %v1503, 0.0
      %1658 = vadd.xlane.f32.xlu0 %v1657
      %v1659 = vpop.xlane.xlu0 %1658
      %v1660 = vsel %vm1191, %v1505, 0.0
      %1661 = vadd.xlane.f32.xlu0 %v1660
      %v1662 = vpop.xlane.xlu0 %1661
      %v1663 = vsel %vm1191, %v1507, 0.0
      %1664 = vadd.xlane.f32.xlu0 %v1663
      %v1665 = vpop.xlane.xlu0 %1664
      %v1666 = vsel %vm1191, %v1509, 0.0
      %1667 = vadd.xlane.f32.xlu0 %v1666
      %v1668 = vpop.xlane.xlu0 %1667
      %v1669 = vsel %vm1191, %v1511, 0.0
      %1670 = vadd.xlane.f32.xlu0 %v1669
      %v1671 = vpop.xlane.xlu0 %1670
      %v1672 = vsel %vm1191, %v1513, 0.0
      %1673 = vadd.xlane.f32.xlu0 %v1672
      %v1674 = vpop.xlane.xlu0 %1673
      %v1675 = vsel %vm1191, %v1515, 0.0
      %1676 = vadd.xlane.f32.xlu0 %v1675
      %v1677 = vpop.xlane.xlu0 %1676
      %v1678 = vsel %vm1191, %v1517, 0.0
      %1679 = vadd.xlane.f32.xlu0 %v1678
      %v1680 = vpop.xlane.xlu0 %1679
      %v1681 = vsel %vm1191, %v1519, 0.0
      %1682 = vadd.xlane.f32.xlu0 %v1681
      %v1683 = vpop.xlane.xlu0 %1682
      %v1684 = vsel %vm1191, %v1521, 0.0
      %1685 = vadd.xlane.f32.xlu0 %v1684
      %v1686 = vpop.xlane.xlu0 %1685
      %v1687 = vsel %vm1191, %v1523, 0.0
      %1688 = vadd.xlane.f32.xlu0 %v1687
      %v1689 = vpop.xlane.xlu0 %1688
      %v1690 = vsel %vm1191, %v1525, 0.0
      %1691 = vadd.xlane.f32.xlu0 %v1690
      %v1692 = vpop.xlane.xlu0 %1691
      %v1693 = vsel %vm1191, %v1527, 0.0
      %1694 = vadd.xlane.f32.xlu0 %v1693
      %v1695 = vpop.xlane.xlu0 %1694
      %v1696 = vsel %vm1191, %v1529, 0.0
      %1697 = vadd.xlane.f32.xlu0 %v1696
      %v1698 = vpop.xlane.xlu0 %1697
      %v1699 = vsel %vm1191, %v1531, 0.0
      %1700 = vadd.xlane.f32.xlu0 %v1699
      %v1701 = vpop.xlane.xlu0 %1700
      %v1702 = vsel %vm1191, %v1533, 0.0
      %1703 = vadd.xlane.f32.xlu0 %v1702
      %v1704 = vpop.xlane.xlu0 %1703
      %v1705 = vsel %vm1191, %v1535, 0.0
      %1706 = vadd.xlane.f32.xlu0 %v1705
      %v1707 = vpop.xlane.xlu0 %1706
      %v1708 = vsel %vm1191, %v1537, 0.0
      %1709 = vadd.xlane.f32.xlu0 %v1708
      %v1710 = vpop.xlane.xlu0 %1709
      %v1711 = vsel %vm1191, %v1539, 0.0
      %1712 = vadd.xlane.f32.xlu0 %v1711
      %v1713 = vpop.xlane.xlu0 %1712
      %v1714 = vsel %vm1191, %v1541, 0.0
      %1715 = vadd.xlane.f32.xlu0 %v1714
      %v1716 = vpop.xlane.xlu0 %1715
      %v1717 = vsel %vm1191, %v1543, 0.0
      %1718 = vadd.xlane.f32.xlu0 %v1717
      %v1719 = vpop.xlane.xlu0 %1718
      %v1720 = vsel %vm1191, %v1545, 0.0
      %1721 = vadd.xlane.f32.xlu0 %v1720
      %v1722 = vpop.xlane.xlu0 %1721
      %v1723 = vsel %vm1191, %v1547, 0.0
      %1724 = vadd.xlane.f32.xlu0 %v1723
      %v1725 = vpop.xlane.xlu0 %1724
      %v1726 = vsel %vm1191, %v1549, 0.0
      %1727 = vadd.xlane.f32.xlu0 %v1726
      %v1728 = vpop.xlane.xlu0 %1727
      %v1729 = vsel %vm1191, %v1551, 0.0
      %1730 = vadd.xlane.f32.xlu0 %v1729
      %v1731 = vpop.xlane.xlu0 %1730
      %v1732 = vsel %vm1191, %v1553, 0.0
      %1733 = vadd.xlane.f32.xlu0 %v1732
      %v1734 = vpop.xlane.xlu0 %1733
      %v1735 = vsel %vm1191, %v1555, 0.0
      %1736 = vadd.xlane.f32.xlu0 %v1735
      %v1737 = vpop.xlane.xlu0 %1736
      %v1738 = vsel %vm1191, %v1557, 0.0
      %1739 = vadd.xlane.f32.xlu0 %v1738
      %v1740 = vpop.xlane.xlu0 %1739
      %v1741 = vsel %vm1191, %v1559, 0.0
      %1742 = vadd.xlane.f32.xlu0 %v1741
      %v1743 = vpop.xlane.xlu0 %1742
      %v1744 = vsel %vm1191, %v1561, 0.0
      %1745 = vadd.xlane.f32.xlu0 %v1744
      %v1746 = vpop.xlane.xlu0 %1745
      %v1747 = vsel %vm1191, %v1563, 0.0
      %1748 = vadd.xlane.f32.xlu0 %v1747
      %v1749 = vpop.xlane.xlu0 %1748
      %v1750 = vsel %vm1191, %v1565, 0.0
      %1751 = vadd.xlane.f32.xlu0 %v1750
      %v1752 = vpop.xlane.xlu0 %1751
      %v1753 = vsel %vm1191, %v1567, 0.0
      %1754 = vadd.xlane.f32.xlu0 %v1753
      %v1755 = vpop.xlane.xlu0 %1754
      %v1756 = vsel %vm1191, %v1569, 0.0
      %1757 = vadd.xlane.f32.xlu0 %v1756
      %v1758 = vpop.xlane.xlu0 %1757
      %v1759 = vsel %vm1191, %v1571, 0.0
      %1760 = vadd.xlane.f32.xlu0 %v1759
      %v1761 = vpop.xlane.xlu0 %1760
      %v1762 = vsel %vm1191, %v1573, 0.0
      %1763 = vadd.xlane.f32.xlu0 %v1762
      %v1764 = vpop.xlane.xlu0 %1763
      %v1765 = vsel %vm1191, %v1575, 0.0
      %1766 = vadd.xlane.f32.xlu0 %v1765
      %v1767 = vpop.xlane.xlu0 %1766
      %v1768 = vrcp.pop %v1578
      %v1769 = vrcp.pop %v1581
      %v1770 = vrcp.pop %v1584
      %v1771 = vrcp.pop %v1587
      %v1772 = vrcp.pop %v1590
      %v1773 = vrcp.pop %v1593
      %v1774 = vrcp.pop %v1596
      %v1775 = vrcp.pop %v1599
      %v1776 = vrcp.pop %v1602
      %v1777 = vrcp.pop %v1605
      %v1778 = vrcp.pop %v1608
      %v1779 = vrcp.pop %v1611
      %v1780 = vrcp.pop %v1614
      %v1781 = vrcp.pop %v1617
      %v1782 = vrcp.pop %v1620
      %v1783 = vrcp.pop %v1623
      %v1784 = vrcp.pop %v1626
      %v1785 = vrcp.pop %v1629
      %v1786 = vrcp.pop %v1632
      %v1787 = vrcp.pop %v1635
      %v1788 = vrcp.pop %v1638
      %v1789 = vrcp.pop %v1641
      %v1790 = vrcp.pop %v1644
      %v1791 = vrcp.pop %v1647
      %v1792 = vrcp.pop %v1650
      %v1793 = vrcp.pop %v1653
      %v1794 = vrcp.pop %v1656
      %v1795 = vrcp.pop %v1659
      %v1796 = vrcp.pop %v1662
      %v1797 = vrcp.pop %v1665
      %v1798 = vrcp.pop %v1668
      %v1799 = vrcp.pop %v1671
      %v1800 = vrcp.pop %v1674
      %v1801 = vrcp.pop %v1677
      %v1802 = vrcp.pop %v1680
      %v1803 = vrcp.pop %v1683
      %v1804 = vrcp.pop %v1686
      %v1805 = vrcp.pop %v1689
      %v1806 = vrcp.pop %v1692
      %v1807 = vrcp.pop %v1695
      %v1808 = vrcp.pop %v1698
      %v1809 = vrcp.pop %v1701
      %v1810 = vrcp.pop %v1704
      %v1811 = vrcp.pop %v1707
      %v1812 = vrcp.pop %v1710
      %v1813 = vrcp.pop %v1713
      %v1814 = vrcp.pop %v1716
      %v1815 = vrcp.pop %v1719
      %v1816 = vrcp.pop %v1722
      %v1817 = vrcp.pop %v1725
      %v1818 = vrcp.pop %v1728
      %v1819 = vrcp.pop %v1731
      %v1820 = vrcp.pop %v1734
      %v1821 = vrcp.pop %v1737
      %v1822 = vrcp.pop %v1740
      %v1823 = vrcp.pop %v1743
      %v1824 = vrcp.pop %v1746
      %v1825 = vrcp.pop %v1749
      %v1826 = vrcp.pop %v1752
      %v1827 = vrcp.pop %v1755
      %v1828 = vrcp.pop %v1758
      %v1829 = vrcp.pop %v1761
      %v1830 = vrcp.pop %v1764
      %v1831 = vrcp.pop %v1767
      %v1832 = vmul.f32 %v1449, %v1768
      %v1833 = vmul.f32 %v1451, %v1769
      %v1834 = vmul.f32 %v1453, %v1770
      %v1835 = vmul.f32 %v1455, %v1771
      %v1836 = vmul.f32 %v1457, %v1772
      %v1837 = vmul.f32 %v1459, %v1773
      %v1838 = vmul.f32 %v1461, %v1774
      %v1839 = vmul.f32 %v1463, %v1775
      %v1840 = vmul.f32 %v1465, %v1776
      %v1841 = vmul.f32 %v1467, %v1777
      %v1842 = vmul.f32 %v1469, %v1778
      %v1843 = vmul.f32 %v1471, %v1779
      %v1844 = vmul.f32 %v1473, %v1780
      %v1845 = vmul.f32 %v1475, %v1781
      %v1846 = vmul.f32 %v1477, %v1782
      %v1847 = vmul.f32 %v1479, %v1783
      %v1848 = vmul.f32 %v1481, %v1784
      %v1849 = vmul.f32 %v1483, %v1785
      %v1850 = vmul.f32 %v1485, %v1786
      %v1851 = vmul.f32 %v1487, %v1787
      %v1852 = vmul.f32 %v1489, %v1788
      %v1853 = vmul.f32 %v1491, %v1789
      %v1854 = vmul.f32 %v1493, %v1790
      %v1855 = vmul.f32 %v1495, %v1791
      %v1856 = vmul.f32 %v1497, %v1792
      %v1857 = vmul.f32 %v1499, %v1793
      %v1858 = vmul.f32 %v1501, %v1794
      %v1859 = vmul.f32 %v1503, %v1795
      %v1860 = vmul.f32 %v1505, %v1796
      %v1861 = vmul.f32 %v1507, %v1797
      %v1862 = vmul.f32 %v1509, %v1798
      %v1863 = vmul.f32 %v1511, %v1799
      %v1864 = vmul.f32 %v1513, %v1800
      %v1865 = vmul.f32 %v1515, %v1801
      %v1866 = vmul.f32 %v1517, %v1802
      %v1867 = vmul.f32 %v1519, %v1803
      %v1868 = vmul.f32 %v1521, %v1804
      %v1869 = vmul.f32 %v1523, %v1805
      %v1870 = vmul.f32 %v1525, %v1806
      %v1871 = vmul.f32 %v1527, %v1807
      %v1872 = vmul.f32 %v1529, %v1808
      %v1873 = vmul.f32 %v1531, %v1809
      %v1874 = vmul.f32 %v1533, %v1810
      %v1875 = vmul.f32 %v1535, %v1811
      %v1876 = vmul.f32 %v1537, %v1812
      %v1877 = vmul.f32 %v1539, %v1813
      %v1878 = vmul.f32 %v1541, %v1814
      %v1879 = vmul.f32 %v1543, %v1815
      %v1880 = vmul.f32 %v1545, %v1816
      %v1881 = vmul.f32 %v1547, %v1817
      %v1882 = vmul.f32 %v1549, %v1818
      %v1883 = vmul.f32 %v1551, %v1819
      %v1884 = vmul.f32 %v1553, %v1820
      %v1885 = vmul.f32 %v1555, %v1821
      %v1886 = vmul.f32 %v1557, %v1822
      %v1887 = vmul.f32 %v1559, %v1823
      %v1888 = vmul.f32 %v1561, %v1824
      %v1889 = vmul.f32 %v1563, %v1825
      %v1890 = vmul.f32 %v1565, %v1826
      %v1891 = vmul.f32 %v1567, %v1827
      %v1892 = vmul.f32 %v1569, %v1828
      %v1893 = vmul.f32 %v1571, %v1829
      %v1894 = vmul.f32 %v1573, %v1830
      %v1895 = vmul.f32 %v1575, %v1831
      %1896 = vst.msk [vmem:[%s226] sm:$0xff] %vm1191, %v1832
      %1897 = vst.msk [vmem:[%s226 + $0x8] sm:$0xff] %vm1191, %v1833
      %1898 = vst.msk [vmem:[%s226 + $0x10] sm:$0xff] %vm1191, %v1834
      %1899 = vst.msk [vmem:[%s226 + $0x18] sm:$0xff] %vm1191, %v1835
      %1900 = vst.msk [vmem:[%s226 + $0x20] sm:$0xff] %vm1191, %v1836
      %1901 = vst.msk [vmem:[%s226 + $0x28] sm:$0xff] %vm1191, %v1837
      %1902 = vst.msk [vmem:[%s226 + $0x30] sm:$0xff] %vm1191, %v1838
      %1903 = vst.msk [vmem:[%s226 + $0x38] sm:$0xff] %vm1191, %v1839
      %1904 = vst.msk [vmem:[%s226 + $0x40] sm:$0xff] %vm1191, %v1840
      %1905 = vst.msk [vmem:[%s226 + $0x48] sm:$0xff] %vm1191, %v1841
      %1906 = vst.msk [vmem:[%s226 + $0x50] sm:$0xff] %vm1191, %v1842
      %1907 = vst.msk [vmem:[%s226 + $0x58] sm:$0xff] %vm1191, %v1843
      %1908 = vst.msk [vmem:[%s226 + $0x60] sm:$0xff] %vm1191, %v1844
      %1909 = vst.msk [vmem:[%s226 + $0x68] sm:$0xff] %vm1191, %v1845
      %1910 = vst.msk [vmem:[%s226 + $0x70] sm:$0xff] %vm1191, %v1846
      %1911 = vst.msk [vmem:[%s226 + $0x78] sm:$0xff] %vm1191, %v1847
      %1912 = vst.msk [vmem:[%s226 + $0x80] sm:$0xff] %vm1191, %v1848
      %1913 = vst.msk [vmem:[%s226 + $0x88] sm:$0xff] %vm1191, %v1849
      %1914 = vst.msk [vmem:[%s226 + $0x90] sm:$0xff] %vm1191, %v1850
      %1915 = vst.msk [vmem:[%s226 + $0x98] sm:$0xff] %vm1191, %v1851
      %1916 = vst.msk [vmem:[%s226 + $0xa0] sm:$0xff] %vm1191, %v1852
      %1917 = vst.msk [vmem:[%s226 + $0xa8] sm:$0xff] %vm1191, %v1853
      %1918 = vst.msk [vmem:[%s226 + $0xb0] sm:$0xff] %vm1191, %v1854
      %1919 = vst.msk [vmem:[%s226 + $0xb8] sm:$0xff] %vm1191, %v1855
      %1920 = vst.msk [vmem:[%s226 + $0xc0] sm:$0xff] %vm1191, %v1856
      %1921 = vst.msk [vmem:[%s226 + $0xc8] sm:$0xff] %vm1191, %v1857
      %1922 = vst.msk [vmem:[%s226 + $0xd0] sm:$0xff] %vm1191, %v1858
      %1923 = vst.msk [vmem:[%s226 + $0xd8] sm:$0xff] %vm1191, %v1859
      %1924 = vst.msk [vmem:[%s226 + $0xe0] sm:$0xff] %vm1191, %v1860
      %1925 = vst.msk [vmem:[%s226 + $0xe8] sm:$0xff] %vm1191, %v1861
      %1926 = vst.msk [vmem:[%s226 + $0xf0] sm:$0xff] %vm1191, %v1862
      %1927 = vst.msk [vmem:[%s226 + $0xf8] sm:$0xff] %vm1191, %v1863
      %1928 = vst.msk [vmem:[%s226 + $0x100] sm:$0xff] %vm1191, %v1864
      %1929 = vst.msk [vmem:[%s226 + $0x108] sm:$0xff] %vm1191, %v1865
      %1930 = vst.msk [vmem:[%s226 + $0x110] sm:$0xff] %vm1191, %v1866
      %1931 = vst.msk [vmem:[%s226 + $0x118] sm:$0xff] %vm1191, %v1867
      %1932 = vst.msk [vmem:[%s226 + $0x120] sm:$0xff] %vm1191, %v1868
      %1933 = vst.msk [vmem:[%s226 + $0x128] sm:$0xff] %vm1191, %v1869
      %1934 = vst.msk [vmem:[%s226 + $0x130] sm:$0xff] %vm1191, %v1870
      %1935 = vst.msk [vmem:[%s226 + $0x138] sm:$0xff] %vm1191, %v1871
      %1936 = vst.msk [vmem:[%s226 + $0x140] sm:$0xff] %vm1191, %v1872
      %1937 = vst.msk [vmem:[%s226 + $0x148] sm:$0xff] %vm1191, %v1873
      %1938 = vst.msk [vmem:[%s226 + $0x150] sm:$0xff] %vm1191, %v1874
      %1939 = vst.msk [vmem:[%s226 + $0x158] sm:$0xff] %vm1191, %v1875
      %1940 = vst.msk [vmem:[%s226 + $0x160] sm:$0xff] %vm1191, %v1876
      %1941 = vst.msk [vmem:[%s226 + $0x168] sm:$0xff] %vm1191, %v1877
      %1942 = vst.msk [vmem:[%s226 + $0x170] sm:$0xff] %vm1191, %v1878
      %1943 = vst.msk [vmem:[%s226 + $0x178] sm:$0xff] %vm1191, %v1879
      %1944 = vst.msk [vmem:[%s226 + $0x180] sm:$0xff] %vm1191, %v1880
      %1945 = vst.msk [vmem:[%s226 + $0x188] sm:$0xff] %vm1191, %v1881
      %1946 = vst.msk [vmem:[%s226 + $0x190] sm:$0xff] %vm1191, %v1882
      %1947 = vst.msk [vmem:[%s226 + $0x198] sm:$0xff] %vm1191, %v1883
      %1948 = vst.msk [vmem:[%s226 + $0x1a0] sm:$0xff] %vm1191, %v1884
      %1949 = vst.msk [vmem:[%s226 + $0x1a8] sm:$0xff] %vm1191, %v1885
      %1950 = vst.msk [vmem:[%s226 + $0x1b0] sm:$0xff] %vm1191, %v1886
      %1951 = vst.msk [vmem:[%s226 + $0x1b8] sm:$0xff] %vm1191, %v1887
      %1952 = vst.msk [vmem:[%s226 + $0x1c0] sm:$0xff] %vm1191, %v1888
      %1953 = vst.msk [vmem:[%s226 + $0x1c8] sm:$0xff] %vm1191, %v1889
      %1954 = vst.msk [vmem:[%s226 + $0x1d0] sm:$0xff] %vm1191, %v1890
      %1955 = vst.msk [vmem:[%s226 + $0x1d8] sm:$0xff] %vm1191, %v1891
      %1956 = vst.msk [vmem:[%s226 + $0x1e0] sm:$0xff] %vm1191, %v1892
      %1957 = vst.msk [vmem:[%s226 + $0x1e8] sm:$0xff] %vm1191, %v1893
      %1958 = vst.msk [vmem:[%s226 + $0x1f0] sm:$0xff] %vm1191, %v1894
      %1959 = vst.msk [vmem:[%s226 + $0x1f8] sm:$0xff] %vm1191, %v1895
      %s1960 = smul.u32 64, %s16
      %p1961 = scmp.lt.s32.totalorder %s1960, 127
      %s1962 = scalar_select %p1961, %s1960, 127
      %s1963 = smul.addr %s1962, 8
      %s1964 = scalar_lea.vmem %s5, %s1963
      // Predicated region
      $region41: #{tpu_custom_call.1} parent=39 // pred_check
        %p1965 = pneg %p144
      $region42: #{tpu_custom_call.1} parent=39 // pred_check_branch
        %1967 = sbr.rel (%p1965) target = $region44
      $region43: #{tpu_custom_call.1} parent=39 // pred_region
        %s1968 = smul.u32 64, %s16
      $region44: #{tpu_custom_call.1} parent=39 // pred_fallthru
        _
    $region40: #{tpu_custom_call.1} parent=5 // pred_fallthru
      _
    %p1969 = scmp.le.s32.totalorder 2, %s11
    // Predicated region
    $region45: #{tpu_custom_call.1} parent=5 // pred_check
      %p1970 = pneg %p1969
    $region46: #{tpu_custom_call.1} parent=5 // pred_check_branch
      %1972 = sbr.rel (%p1970) target = $region48
    $region47: #{tpu_custom_call.1} parent=5 // pred_region
      %s1973 = ssub.s32 %s11, 2
      // Predicated region
      $region49: #{tpu_custom_call.1} parent=47 // pred_check
        %p1974 = pneg %p150
      $region50: #{tpu_custom_call.1} parent=47 // pred_check_branch
        %1976 = sbr.rel (%p1974) target = $region52
      $region51: #{tpu_custom_call.1} parent=47 // pred_region
        %s1977 = smul.u32 64, %s17
        %p1978 = scmp.lt.s32.totalorder %s1977, 127
        %s1979 = scalar_select %p1978, %s1977, 127
        %s1980 = smul.addr %s1979, 8
        %s1981 = scalar_lea.vmem %s5, %s1980
      $region52: #{tpu_custom_call.1} parent=47 // pred_fallthru
        _
    $region48: #{tpu_custom_call.1} parent=5 // pred_fallthru
      _
  $region6: #{tpu_custom_call.1} parent=0 // loop_footer
    %s15 = sadd.s32 1, %s11
  $region7: #{tpu_custom_call.1} parent=0 // loop_footer_branch
    %10 = sbr.rel target = $region3
  $region8: #{tpu_custom_call.1} parent=0 // loop_exit
    _

</llo_original>
